<compile_context>
chip_gen: v6e
topology: v6e:2x2x1
jax: 0.10.0
libtpu: 0.0.40
codegen_flags: <defaults>
</compile_context>

<pallas_src>
import functools

import numpy as np
import jax
import jax.numpy as jnp
from jax.experimental import pallas as pl
from jax.experimental.pallas import tpu as pltpu


def _decoder_kernel(x_ref, h0_ref,
                    w1_ref, b1_ref, w2_ref, b2_ref,
                    a1_ref, a2_ref,
                    wih_ref, bih_ref, whh_ref, bhh_ref,
                    wout_ref, bout_ref, hpad_ref,
                    logits_ref, hout_ref,
                    *, T, Bp, H):
    f32 = jnp.float32
    a1 = a1_ref[0, 0]          # PReLU slopes from SMEM (scalar path)
    a2 = a2_ref[0, 0]

    # ---- hoisted, time-batched work over (T*Bp, H) ----
    x = x_ref[...]
    y = jnp.dot(x, w1_ref[...], preferred_element_type=f32) + b1_ref[...]
    y = jnp.where(y >= 0, y, a1 * y)
    y = jnp.dot(y, w2_ref[...], preferred_element_type=f32) + b2_ref[...]
    y = jnp.where(y >= 0, y, a2 * y)

    # input-side GRU gate projection for the whole sequence: (T*Bp, 3H)
    gi = jnp.dot(y, wih_ref[...], preferred_element_type=f32) + bih_ref[...]

    whh = whh_ref[...]         # (H, 3H)
    bhh = bhh_ref[...]         # (1, 3H)

    def sigmoid1(v):
        # sigmoid(x) == 0.5*tanh(0.5*x) + 0.5 : exactly one EUP op per gate.
        return 0.5 * jnp.tanh(0.5 * v) + 0.5

    # ---- sequential recurrence (only h-dependent work inside) ----
    # Static Python loop == fully-unrolled for T=8; all slices static.
    h = h0_ref[...]            # (Bp, H)
    acc = jnp.zeros_like(h)
    for t in range(T):
        gh = jnp.dot(h, whh, preferred_element_type=f32) + bhh       # (Bp, 3H)
        gi_t = gi[t * Bp:(t + 1) * Bp, :]                             # (Bp, 3H)
        r = sigmoid1(gi_t[:, 0:H] + gh[:, 0:H])
        z = sigmoid1(gi_t[:, H:2 * H] + gh[:, H:2 * H])
        n = jnp.tanh(gi_t[:, 2 * H:3 * H] + r * gh[:, 2 * H:3 * H])
        h = n + z * (h - n)                                           # == (1-z)*n + z*h
        acc = acc + h

    # ---- finalize ----
    # logits = sum_t(h_t) @ Wout^T + bout  (Wout pre-padded to 128-lane Vp)
    logits_ref[...] = (jnp.dot(acc, wout_ref[...], preferred_element_type=f32)
                       + bout_ref[...]).astype(logits_ref.dtype)
    # Lane-dense hidden store: widen h (Bp,H) -> (Bp,128) through a tiny
    # identity-embed matmul so the final vst is unmasked/full-lane.
    hout_ref[...] = jnp.dot(h, hpad_ref[...],
                            preferred_element_type=f32).astype(hout_ref.dtype)


def prepare_decoder_params(params):
    """One-time parameter prep (hoisted out of the per-call path).

    Transposes Linear/GRU weights to (in, out) so the kernel does x @ W^T,
    casts everything to f32, reshapes biases to broadcastable rows, pads the
    output projection to a 128-lane-dense width, and builds the identity
    lane-pad matrix for the hidden-state output.  Returns a dict of arrays
    only (safe to pass through jit as a pytree).
    """
    f32 = jnp.float32
    H = params["W1"].shape[0]
    V = params["Wout"].shape[0]
    Vp = ((V + 127) // 128) * 128     # lane-dense logits width
    Hp = max(128, ((H + 127) // 128) * 128)  # lane-dense hidden width

    def row(v, width=None):
        v = jnp.asarray(v, f32).reshape(1, -1)
        if width is not None and v.shape[1] < width:
            v = jnp.pad(v, ((0, 0), (0, width - v.shape[1])))
        return v

    return {
        "W1t":   jnp.asarray(params["W1"], f32).T,                     # (H, H)
        "b1":    row(params["b1"]),
        "W2t":   jnp.asarray(params["W2"], f32).T,                     # (H, H)
        "b2":    row(params["b2"]),
        "a1":    jnp.asarray(params["a1"], f32).reshape(1, 1),
        "a2":    jnp.asarray(params["a2"], f32).reshape(1, 1),
        "Wih_t": jnp.asarray(params["Wih"], f32).T,                    # (H, 3H) r,z,n
        "bih":   row(params["bih"]),
        "Whh_t": jnp.asarray(params["Whh"], f32).T,                    # (H, 3H)
        "bhh":   row(params["bhh"]),
        "Wout_t": jnp.pad(jnp.asarray(params["Wout"], f32).T,
                          ((0, 0), (0, Vp - V))),                      # (H, Vp)
        "bout":  row(params["bout"], Vp),
        "hpad":  jnp.eye(H, Hp, dtype=f32),                            # (H, Hp) identity embed
    }


@functools.partial(jax.jit, static_argnames=("V",))
def vanilla_decoder_forward(context_hidden, context_output, prepped, *, V):
    """context_hidden: (1, B, H), context_output: (T, B, H)
       prepped: output of prepare_decoder_params()
       -> (logits (B, V), hidden (1, B, H))"""
    T, B, H = context_output.shape
    Vp = prepped["Wout_t"].shape[1]
    Hp = prepped["hpad"].shape[1]
    f32 = jnp.float32

    Bp = ((B + 7) // 8) * 8          # sublane-multiple batch

    # Per-call activation prep only: pad batch, flatten time into rows.
    x = jnp.pad(context_output.astype(f32), ((0, 0), (0, Bp - B), (0, 0)))
    x = x.reshape(T * Bp, H)
    h0 = jnp.pad(context_hidden[0].astype(f32), ((0, Bp - B), (0, 0)))   # (Bp, H)

    def vmem():
        return pl.BlockSpec(memory_space=pltpu.MemorySpace.VMEM)

    def smem():
        return pl.BlockSpec(memory_space=pltpu.MemorySpace.SMEM)

    in_specs = [vmem(), vmem(),                  # x, h0
                vmem(), vmem(), vmem(), vmem(),  # W1t, b1, W2t, b2
                smem(), smem(),                  # a1, a2 (PReLU scalars)
                vmem(), vmem(), vmem(), vmem(),  # Wih_t, bih, Whh_t, bhh
                vmem(), vmem(), vmem()]          # Wout_t, bout, hpad

    kernel = functools.partial(_decoder_kernel, T=T, Bp=Bp, H=H)

    # Gridless single invocation, everything VMEM-resident; no compiler_params
    # (no tiling / pipelining needed at <200 KiB working set on any TPU gen).
    logits_p, h_p = pl.pallas_call(
        kernel,
        out_shape=(jax.ShapeDtypeStruct((Bp, Vp), f32),
                   jax.ShapeDtypeStruct((Bp, Hp), f32)),
        in_specs=in_specs,
        out_specs=(vmem(), vmem()),
    )(x, h0,
      prepped["W1t"], prepped["b1"], prepped["W2t"], prepped["b2"],
      prepped["a1"], prepped["a2"],
      prepped["Wih_t"], prepped["bih"], prepped["Whh_t"], prepped["bhh"],
      prepped["Wout_t"], prepped["bout"], prepped["hpad"])

    return logits_p[:B, :V], h_p[:B, :H][None]


def _reference(context_hidden, context_output, p):
    """Pure-JAX reference mirroring the PyTorch forward exactly."""
    def prelu(x, a):
        return jnp.where(x >= 0, x, a * x)

    x = prelu(context_output @ p["W1"].T + p["b1"], p["a1"])
    x = prelu(x @ p["W2"].T + p["b2"], p["a2"])
    h = context_hidden[0]
    H = h.shape[-1]
    Wih, Whh, bih, bhh = p["Wih"], p["Whh"], p["bih"], p["bhh"]
    outs = []
    for t in range(x.shape[0]):
        gi = x[t] @ Wih.T + bih
        gh = h @ Whh.T + bhh
        r = jax.nn.sigmoid(gi[:, :H] + gh[:, :H])
        z = jax.nn.sigmoid(gi[:, H:2 * H] + gh[:, H:2 * H])
        n = jnp.tanh(gi[:, 2 * H:] + r * gh[:, 2 * H:])
        h = (1.0 - z) * n + z * h
        outs.append(h)
    s = jnp.stack(outs).sum(0)
    logits = s @ p["Wout"].T + p["bout"]
    return logits, h[None]


if __name__ == "__main__":
    # Small shapes implied by the forward: hidden_size=32, output_size=40,
    # seq_len=8, batch=4.
    H, V, T, B = 32, 40, 8, 4
    key = jax.random.PRNGKey(0)
    ks = jax.random.split(key, 12)

    params = {
        "W1": jax.random.normal(ks[0], (H, H), jnp.float32) * 0.1,
        "b1": jax.random.normal(ks[1], (H,), jnp.float32) * 0.1,
        "a1": jnp.array(0.25, jnp.float32),          # nn.PReLU default init
        "W2": jax.random.normal(ks[2], (H, H), jnp.float32) * 0.1,
        "b2": jax.random.normal(ks[3], (H,), jnp.float32) * 0.1,
        "a2": jnp.array(0.25, jnp.float32),
        "Wih": jax.random.normal(ks[4], (3 * H, H), jnp.float32) * 0.1,
        "Whh": jax.random.normal(ks[5], (3 * H, H), jnp.float32) * 0.1,
        "bih": jax.random.normal(ks[6], (3 * H,), jnp.float32) * 0.1,
        "bhh": jax.random.normal(ks[7], (3 * H,), jnp.float32) * 0.1,
        "Wout": jax.random.normal(ks[8], (V, H), jnp.float32) * 0.1,
        "bout": jax.random.normal(ks[9], (V,), jnp.float32) * 0.1,
    }
    # TODO(synk): the embedding table / autoregressive decode loop (evaluate,
    # _decode_to_index/_decode_to_indices) are unused by forward() and are not
    # implemented here.

    context_hidden = jax.random.normal(ks[10], (1, B, H), jnp.float32)
    context_output = jax.random.normal(ks[11], (T, B, H), jnp.float32)

    # One-time parameter prep (hoisted out of the per-call path).
    prepped = prepare_decoder_params(params)

    logits, h_out = vanilla_decoder_forward(context_hidden, context_output,
                                            prepped, V=V)
    logits, h_out = jax.block_until_ready((logits, h_out))

    ref_logits, ref_h = _reference(context_hidden, context_output, params)
    np.testing.assert_allclose(np.asarray(logits), np.asarray(ref_logits),
                               rtol=1e-4, atol=1e-4)
    np.testing.assert_allclose(np.asarray(h_out), np.asarray(ref_h),
                               rtol=1e-4, atol=1e-4)
    print("KERNEL_OK")
</pallas_src>

<mosaic_0001>
module attributes {stable_mosaic.version = 11 : i64} {
  func.func @_decoder_kernel(%arg0: memref<64x32xf32, #tpu.memory_space<vmem>>, %arg1: memref<8x32xf32, #tpu.memory_space<vmem>>, %arg2: memref<32x32xf32, #tpu.memory_space<vmem>>, %arg3: memref<1x32xf32, #tpu.memory_space<vmem>>, %arg4: memref<32x32xf32, #tpu.memory_space<vmem>>, %arg5: memref<1x32xf32, #tpu.memory_space<vmem>>, %arg6: memref<1x1xf32, #tpu.memory_space<smem>>, %arg7: memref<1x1xf32, #tpu.memory_space<smem>>, %arg8: memref<32x96xf32, #tpu.memory_space<vmem>>, %arg9: memref<1x96xf32, #tpu.memory_space<vmem>>, %arg10: memref<32x96xf32, #tpu.memory_space<vmem>>, %arg11: memref<1x96xf32, #tpu.memory_space<vmem>>, %arg12: memref<32x128xf32, #tpu.memory_space<vmem>>, %arg13: memref<1x128xf32, #tpu.memory_space<vmem>>, %arg14: memref<32x128xf32, #tpu.memory_space<vmem>>, %arg15: memref<8x128xf32, #tpu.memory_space<vmem>>, %arg16: memref<8x128xf32, #tpu.memory_space<vmem>>) attributes {dimension_semantics = [], scalar_prefetch = 0 : i64, scratch_operands = 0 : i64, tpu.core_type = #tpu.core_type<tc>} {
    %c0 = arith.constant 0 : index
    %c0_0 = arith.constant 0 : index
    %0 = memref.load %arg6[%c0, %c0_0] : memref<1x1xf32, #tpu.memory_space<smem>>
    %c0_1 = arith.constant 0 : index
    %c0_2 = arith.constant 0 : index
    %1 = memref.load %arg7[%c0_1, %c0_2] : memref<1x1xf32, #tpu.memory_space<smem>>
    %c0_3 = arith.constant 0 : index
    %c0_4 = arith.constant 0 : index
    %2 = vector.load %arg0[%c0_3, %c0_4] : memref<64x32xf32, #tpu.memory_space<vmem>>, vector<64x32xf32>
    %c0_5 = arith.constant 0 : index
    %c0_6 = arith.constant 0 : index
    %3 = vector.load %arg2[%c0_5, %c0_6] : memref<32x32xf32, #tpu.memory_space<vmem>>, vector<32x32xf32>
    %cst = arith.constant dense<0.000000e+00> : vector<64x32xf32>
    %4 = tpu.matmul %2, %3, %cst {dimension_numbers = #tpu.dot_dimension_numbers<[1], [0], [0], [1], [0, 0, 1, 1], [], []>} : vector<64x32xf32>, vector<32x32xf32>, vector<64x32xf32> -> vector<64x32xf32>
    %c0_7 = arith.constant 0 : index
    %c0_8 = arith.constant 0 : index
    %5 = vector.load %arg3[%c0_7, %c0_8] : memref<1x32xf32, #tpu.memory_space<vmem>>, vector<1x32xf32>
    %6 = vector.broadcast %5 : vector<1x32xf32> to vector<64x32xf32>
    %7 = arith.addf %4, %6 : vector<64x32xf32>
    %cst_9 = arith.constant 0.000000e+00 : f32
    %8 = vector.broadcast %cst_9 : f32 to vector<64x32xf32>
    %9 = arith.cmpf oge, %7, %8 : vector<64x32xf32>
    %10 = vector.broadcast %0 : f32 to vector<64x32xf32>
    %11 = arith.mulf %10, %7 : vector<64x32xf32>
    %12 = arith.select %9, %7, %11 : vector<64x32xi1>, vector<64x32xf32>
    %c0_10 = arith.constant 0 : index
    %c0_11 = arith.constant 0 : index
    %13 = vector.load %arg4[%c0_10, %c0_11] : memref<32x32xf32, #tpu.memory_space<vmem>>, vector<32x32xf32>
    %cst_12 = arith.constant dense<0.000000e+00> : vector<64x32xf32>
    %14 = tpu.matmul %12, %13, %cst_12 {dimension_numbers = #tpu.dot_dimension_numbers<[1], [0], [0], [1], [0, 0, 1, 1], [], []>} : vector<64x32xf32>, vector<32x32xf32>, vector<64x32xf32> -> vector<64x32xf32>
    %c0_13 = arith.constant 0 : index
    %c0_14 = arith.constant 0 : index
    %15 = vector.load %arg5[%c0_13, %c0_14] : memref<1x32xf32, #tpu.memory_space<vmem>>, vector<1x32xf32>
    %16 = vector.broadcast %15 : vector<1x32xf32> to vector<64x32xf32>
    %17 = arith.addf %14, %16 : vector<64x32xf32>
    %cst_15 = arith.constant 0.000000e+00 : f32
    %18 = vector.broadcast %cst_15 : f32 to vector<64x32xf32>
    %19 = arith.cmpf oge, %17, %18 : vector<64x32xf32>
    %20 = vector.broadcast %1 : f32 to vector<64x32xf32>
    %21 = arith.mulf %20, %17 : vector<64x32xf32>
    %22 = arith.select %19, %17, %21 : vector<64x32xi1>, vector<64x32xf32>
    %c0_16 = arith.constant 0 : index
    %c0_17 = arith.constant 0 : index
    %23 = vector.load %arg8[%c0_16, %c0_17] : memref<32x96xf32, #tpu.memory_space<vmem>>, vector<32x96xf32>
    %cst_18 = arith.constant dense<0.000000e+00> : vector<64x96xf32>
    %24 = tpu.matmul %22, %23, %cst_18 {dimension_numbers = #tpu.dot_dimension_numbers<[1], [0], [0], [1], [0, 0, 1, 1], [], []>} : vector<64x32xf32>, vector<32x96xf32>, vector<64x96xf32> -> vector<64x96xf32>
    %c0_19 = arith.constant 0 : index
    %c0_20 = arith.constant 0 : index
    %25 = vector.load %arg9[%c0_19, %c0_20] : memref<1x96xf32, #tpu.memory_space<vmem>>, vector<1x96xf32>
    %26 = vector.broadcast %25 : vector<1x96xf32> to vector<64x96xf32>
    %27 = arith.addf %24, %26 : vector<64x96xf32>
    %c0_21 = arith.constant 0 : index
    %c0_22 = arith.constant 0 : index
    %28 = vector.load %arg10[%c0_21, %c0_22] : memref<32x96xf32, #tpu.memory_space<vmem>>, vector<32x96xf32>
    %c0_23 = arith.constant 0 : index
    %c0_24 = arith.constant 0 : index
    %29 = vector.load %arg11[%c0_23, %c0_24] : memref<1x96xf32, #tpu.memory_space<vmem>>, vector<1x96xf32>
    %c0_25 = arith.constant 0 : index
    %c0_26 = arith.constant 0 : index
    %30 = vector.load %arg1[%c0_25, %c0_26] : memref<8x32xf32, #tpu.memory_space<vmem>>, vector<8x32xf32>
    %cst_27 = arith.constant 0.000000e+00 : f32
    %31 = vector.broadcast %cst_27 : f32 to vector<8x32xf32>
    %cst_28 = arith.constant dense<0.000000e+00> : vector<8x96xf32>
    %32 = tpu.matmul %30, %28, %cst_28 {dimension_numbers = #tpu.dot_dimension_numbers<[1], [0], [0], [1], [0, 0, 1, 1], [], []>} : vector<8x32xf32>, vector<32x96xf32>, vector<8x96xf32> -> vector<8x96xf32>
    %33 = vector.broadcast %29 : vector<1x96xf32> to vector<8x96xf32>
    %34 = arith.addf %32, %33 : vector<8x96xf32>
    %35 = vector.extract_strided_slice %27 {offsets = [0, 0], sizes = [8, 96], strides = [1, 1]} : vector<64x96xf32> to vector<8x96xf32>
    %36 = vector.extract_strided_slice %35 {offsets = [0, 0], sizes = [8, 32], strides = [1, 1]} : vector<8x96xf32> to vector<8x32xf32>
    %37 = vector.extract_strided_slice %34 {offsets = [0, 0], sizes = [8, 32], strides = [1, 1]} : vector<8x96xf32> to vector<8x32xf32>
    %38 = arith.addf %36, %37 : vector<8x32xf32>
    %cst_29 = arith.constant 5.000000e-01 : f32
    %39 = vector.broadcast %cst_29 : f32 to vector<8x32xf32>
    %40 = arith.mulf %39, %38 : vector<8x32xf32>
    %41 = math.tanh %40 : vector<8x32xf32>
    %cst_30 = arith.constant 5.000000e-01 : f32
    %42 = vector.broadcast %cst_30 : f32 to vector<8x32xf32>
    %43 = arith.mulf %42, %41 : vector<8x32xf32>
    %cst_31 = arith.constant 5.000000e-01 : f32
    %44 = vector.broadcast %cst_31 : f32 to vector<8x32xf32>
    %45 = arith.addf %43, %44 : vector<8x32xf32>
    %46 = vector.extract_strided_slice %35 {offsets = [0, 32], sizes = [8, 32], strides = [1, 1]} : vector<8x96xf32> to vector<8x32xf32>
    %47 = vector.extract_strided_slice %34 {offsets = [0, 32], sizes = [8, 32], strides = [1, 1]} : vector<8x96xf32> to vector<8x32xf32>
    %48 = arith.addf %46, %47 : vector<8x32xf32>
    %cst_32 = arith.constant 5.000000e-01 : f32
    %49 = vector.broadcast %cst_32 : f32 to vector<8x32xf32>
    %50 = arith.mulf %49, %48 : vector<8x32xf32>
    %51 = math.tanh %50 : vector<8x32xf32>
    %cst_33 = arith.constant 5.000000e-01 : f32
    %52 = vector.broadcast %cst_33 : f32 to vector<8x32xf32>
    %53 = arith.mulf %52, %51 : vector<8x32xf32>
    %cst_34 = arith.constant 5.000000e-01 : f32
    %54 = vector.broadcast %cst_34 : f32 to vector<8x32xf32>
    %55 = arith.addf %53, %54 : vector<8x32xf32>
    %56 = vector.extract_strided_slice %35 {offsets = [0, 64], sizes = [8, 32], strides = [1, 1]} : vector<8x96xf32> to vector<8x32xf32>
    %57 = vector.extract_strided_slice %34 {offsets = [0, 64], sizes = [8, 32], strides = [1, 1]} : vector<8x96xf32> to vector<8x32xf32>
    %58 = arith.mulf %45, %57 : vector<8x32xf32>
    %59 = arith.addf %56, %58 : vector<8x32xf32>
    %60 = math.tanh %59 : vector<8x32xf32>
    %61 = arith.subf %30, %60 : vector<8x32xf32>
    %62 = arith.mulf %55, %61 : vector<8x32xf32>
    %63 = arith.addf %60, %62 : vector<8x32xf32>
    %64 = arith.addf %31, %63 : vector<8x32xf32>
    %cst_35 = arith.constant dense<0.000000e+00> : vector<8x96xf32>
    %65 = tpu.matmul %63, %28, %cst_35 {dimension_numbers = #tpu.dot_dimension_numbers<[1], [0], [0], [1], [0, 0, 1, 1], [], []>} : vector<8x32xf32>, vector<32x96xf32>, vector<8x96xf32> -> vector<8x96xf32>
    %66 = vector.broadcast %29 : vector<1x96xf32> to vector<8x96xf32>
    %67 = arith.addf %65, %66 : vector<8x96xf32>
    %68 = vector.extract_strided_slice %27 {offsets = [8, 0], sizes = [8, 96], strides = [1, 1]} : vector<64x96xf32> to vector<8x96xf32>
    %69 = vector.extract_strided_slice %68 {offsets = [0, 0], sizes = [8, 32], strides = [1, 1]} : vector<8x96xf32> to vector<8x32xf32>
    %70 = vector.extract_strided_slice %67 {offsets = [0, 0], sizes = [8, 32], strides = [1, 1]} : vector<8x96xf32> to vector<8x32xf32>
    %71 = arith.addf %69, %70 : vector<8x32xf32>
    %cst_36 = arith.constant 5.000000e-01 : f32
    %72 = vector.broadcast %cst_36 : f32 to vector<8x32xf32>
    %73 = arith.mulf %72, %71 : vector<8x32xf32>
    %74 = math.tanh %73 : vector<8x32xf32>
    %cst_37 = arith.constant 5.000000e-01 : f32
    %75 = vector.broadcast %cst_37 : f32 to vector<8x32xf32>
    %76 = arith.mulf %75, %74 : vector<8x32xf32>
    %cst_38 = arith.constant 5.000000e-01 : f32
    %77 = vector.broadcast %cst_38 : f32 to vector<8x32xf32>
    %78 = arith.addf %76, %77 : vector<8x32xf32>
    %79 = vector.extract_strided_slice %68 {offsets = [0, 32], sizes = [8, 32], strides = [1, 1]} : vector<8x96xf32> to vector<8x32xf32>
    %80 = vector.extract_strided_slice %67 {offsets = [0, 32], sizes = [8, 32], strides = [1, 1]} : vector<8x96xf32> to vector<8x32xf32>
    %81 = arith.addf %79, %80 : vector<8x32xf32>
    %cst_39 = arith.constant 5.000000e-01 : f32
    %82 = vector.broadcast %cst_39 : f32 to vector<8x32xf32>
    %83 = arith.mulf %82, %81 : vector<8x32xf32>
    %84 = math.tanh %83 : vector<8x32xf32>
    %cst_40 = arith.constant 5.000000e-01 : f32
    %85 = vector.broadcast %cst_40 : f32 to vector<8x32xf32>
    %86 = arith.mulf %85, %84 : vector<8x32xf32>
    %cst_41 = arith.constant 5.000000e-01 : f32
    %87 = vector.broadcast %cst_41 : f32 to vector<8x32xf32>
    %88 = arith.addf %86, %87 : vector<8x32xf32>
    %89 = vector.extract_strided_slice %68 {offsets = [0, 64], sizes = [8, 32], strides = [1, 1]} : vector<8x96xf32> to vector<8x32xf32>
    %90 = vector.extract_strided_slice %67 {offsets = [0, 64], sizes = [8, 32], strides = [1, 1]} : vector<8x96xf32> to vector<8x32xf32>
    %91 = arith.mulf %78, %90 : vector<8x32xf32>
    %92 = arith.addf %89, %91 : vector<8x32xf32>
    %93 = math.tanh %92 : vector<8x32xf32>
    %94 = arith.subf %63, %93 : vector<8x32xf32>
    %95 = arith.mulf %88, %94 : vector<8x32xf32>
    %96 = arith.addf %93, %95 : vector<8x32xf32>
    %97 = arith.addf %64, %96 : vector<8x32xf32>
    %cst_42 = arith.constant dense<0.000000e+00> : vector<8x96xf32>
    %98 = tpu.matmul %96, %28, %cst_42 {dimension_numbers = #tpu.dot_dimension_numbers<[1], [0], [0], [1], [0, 0, 1, 1], [], []>} : vector<8x32xf32>, vector<32x96xf32>, vector<8x96xf32> -> vector<8x96xf32>
    %99 = vector.broadcast %29 : vector<1x96xf32> to vector<8x96xf32>
    %100 = arith.addf %98, %99 : vector<8x96xf32>
    %101 = vector.extract_strided_slice %27 {offsets = [16, 0], sizes = [8, 96], strides = [1, 1]} : vector<64x96xf32> to vector<8x96xf32>
    %102 = vector.extract_strided_slice %101 {offsets = [0, 0], sizes = [8, 32], strides = [1, 1]} : vector<8x96xf32> to vector<8x32xf32>
    %103 = vector.extract_strided_slice %100 {offsets = [0, 0], sizes = [8, 32], strides = [1, 1]} : vector<8x96xf32> to vector<8x32xf32>
    %104 = arith.addf %102, %103 : vector<8x32xf32>
    %cst_43 = arith.constant 5.000000e-01 : f32
    %105 = vector.broadcast %cst_43 : f32 to vector<8x32xf32>
    %106 = arith.mulf %105, %104 : vector<8x32xf32>
    %107 = math.tanh %106 : vector<8x32xf32>
    %cst_44 = arith.constant 5.000000e-01 : f32
    %108 = vector.broadcast %cst_44 : f32 to vector<8x32xf32>
    %109 = arith.mulf %108, %107 : vector<8x32xf32>
    %cst_45 = arith.constant 5.000000e-01 : f32
    %110 = vector.broadcast %cst_45 : f32 to vector<8x32xf32>
    %111 = arith.addf %109, %110 : vector<8x32xf32>
    %112 = vector.extract_strided_slice %101 {offsets = [0, 32], sizes = [8, 32], strides = [1, 1]} : vector<8x96xf32> to vector<8x32xf32>
    %113 = vector.extract_strided_slice %100 {offsets = [0, 32], sizes = [8, 32], strides = [1, 1]} : vector<8x96xf32> to vector<8x32xf32>
    %114 = arith.addf %112, %113 : vector<8x32xf32>
    %cst_46 = arith.constant 5.000000e-01 : f32
    %115 = vector.broadcast %cst_46 : f32 to vector<8x32xf32>
    %116 = arith.mulf %115, %114 : vector<8x32xf32>
    %117 = math.tanh %116 : vector<8x32xf32>
    %cst_47 = arith.constant 5.000000e-01 : f32
    %118 = vector.broadcast %cst_47 : f32 to vector<8x32xf32>
    %119 = arith.mulf %118, %117 : vector<8x32xf32>
    %cst_48 = arith.constant 5.000000e-01 : f32
    %120 = vector.broadcast %cst_48 : f32 to vector<8x32xf32>
    %121 = arith.addf %119, %120 : vector<8x32xf32>
    %122 = vector.extract_strided_slice %101 {offsets = [0, 64], sizes = [8, 32], strides = [1, 1]} : vector<8x96xf32> to vector<8x32xf32>
    %123 = vector.extract_strided_slice %100 {offsets = [0, 64], sizes = [8, 32], strides = [1, 1]} : vector<8x96xf32> to vector<8x32xf32>
    %124 = arith.mulf %111, %123 : vector<8x32xf32>
    %125 = arith.addf %122, %124 : vector<8x32xf32>
    %126 = math.tanh %125 : vector<8x32xf32>
    %127 = arith.subf %96, %126 : vector<8x32xf32>
    %128 = arith.mulf %121, %127 : vector<8x32xf32>
    %129 = arith.addf %126, %128 : vector<8x32xf32>
    %130 = arith.addf %97, %129 : vector<8x32xf32>
    %cst_49 = arith.constant dense<0.000000e+00> : vector<8x96xf32>
    %131 = tpu.matmul %129, %28, %cst_49 {dimension_numbers = #tpu.dot_dimension_numbers<[1], [0], [0], [1], [0, 0, 1, 1], [], []>} : vector<8x32xf32>, vector<32x96xf32>, vector<8x96xf32> -> vector<8x96xf32>
    %132 = vector.broadcast %29 : vector<1x96xf32> to vector<8x96xf32>
    %133 = arith.addf %131, %132 : vector<8x96xf32>
    %134 = vector.extract_strided_slice %27 {offsets = [24, 0], sizes = [8, 96], strides = [1, 1]} : vector<64x96xf32> to vector<8x96xf32>
    %135 = vector.extract_strided_slice %134 {offsets = [0, 0], sizes = [8, 32], strides = [1, 1]} : vector<8x96xf32> to vector<8x32xf32>
    %136 = vector.extract_strided_slice %133 {offsets = [0, 0], sizes = [8, 32], strides = [1, 1]} : vector<8x96xf32> to vector<8x32xf32>
    %137 = arith.addf %135, %136 : vector<8x32xf32>
    %cst_50 = arith.constant 5.000000e-01 : f32
    %138 = vector.broadcast %cst_50 : f32 to vector<8x32xf32>
    %139 = arith.mulf %138, %137 : vector<8x32xf32>
    %140 = math.tanh %139 : vector<8x32xf32>
    %cst_51 = arith.constant 5.000000e-01 : f32
    %141 = vector.broadcast %cst_51 : f32 to vector<8x32xf32>
    %142 = arith.mulf %141, %140 : vector<8x32xf32>
    %cst_52 = arith.constant 5.000000e-01 : f32
    %143 = vector.broadcast %cst_52 : f32 to vector<8x32xf32>
    %144 = arith.addf %142, %143 : vector<8x32xf32>
    %145 = vector.extract_strided_slice %134 {offsets = [0, 32], sizes = [8, 32], strides = [1, 1]} : vector<8x96xf32> to vector<8x32xf32>
    %146 = vector.extract_strided_slice %133 {offsets = [0, 32], sizes = [8, 32], strides = [1, 1]} : vector<8x96xf32> to vector<8x32xf32>
    %147 = arith.addf %145, %146 : vector<8x32xf32>
    %cst_53 = arith.constant 5.000000e-01 : f32
    %148 = vector.broadcast %cst_53 : f32 to vector<8x32xf32>
    %149 = arith.mulf %148, %147 : vector<8x32xf32>
    %150 = math.tanh %149 : vector<8x32xf32>
    %cst_54 = arith.constant 5.000000e-01 : f32
    %151 = vector.broadcast %cst_54 : f32 to vector<8x32xf32>
    %152 = arith.mulf %151, %150 : vector<8x32xf32>
    %cst_55 = arith.constant 5.000000e-01 : f32
    %153 = vector.broadcast %cst_55 : f32 to vector<8x32xf32>
    %154 = arith.addf %152, %153 : vector<8x32xf32>
    %155 = vector.extract_strided_slice %134 {offsets = [0, 64], sizes = [8, 32], strides = [1, 1]} : vector<8x96xf32> to vector<8x32xf32>
    %156 = vector.extract_strided_slice %133 {offsets = [0, 64], sizes = [8, 32], strides = [1, 1]} : vector<8x96xf32> to vector<8x32xf32>
    %157 = arith.mulf %144, %156 : vector<8x32xf32>
    %158 = arith.addf %155, %157 : vector<8x32xf32>
    %159 = math.tanh %158 : vector<8x32xf32>
    %160 = arith.subf %129, %159 : vector<8x32xf32>
    %161 = arith.mulf %154, %160 : vector<8x32xf32>
    %162 = arith.addf %159, %161 : vector<8x32xf32>
    %163 = arith.addf %130, %162 : vector<8x32xf32>
    %cst_56 = arith.constant dense<0.000000e+00> : vector<8x96xf32>
    %164 = tpu.matmul %162, %28, %cst_56 {dimension_numbers = #tpu.dot_dimension_numbers<[1], [0], [0], [1], [0, 0, 1, 1], [], []>} : vector<8x32xf32>, vector<32x96xf32>, vector<8x96xf32> -> vector<8x96xf32>
    %165 = vector.broadcast %29 : vector<1x96xf32> to vector<8x96xf32>
    %166 = arith.addf %164, %165 : vector<8x96xf32>
    %167 = vector.extract_strided_slice %27 {offsets = [32, 0], sizes = [8, 96], strides = [1, 1]} : vector<64x96xf32> to vector<8x96xf32>
    %168 = vector.extract_strided_slice %167 {offsets = [0, 0], sizes = [8, 32], strides = [1, 1]} : vector<8x96xf32> to vector<8x32xf32>
    %169 = vector.extract_strided_slice %166 {offsets = [0, 0], sizes = [8, 32], strides = [1, 1]} : vector<8x96xf32> to vector<8x32xf32>
    %170 = arith.addf %168, %169 : vector<8x32xf32>
    %cst_57 = arith.constant 5.000000e-01 : f32
    %171 = vector.broadcast %cst_57 : f32 to vector<8x32xf32>
    %172 = arith.mulf %171, %170 : vector<8x32xf32>
    %173 = math.tanh %172 : vector<8x32xf32>
    %cst_58 = arith.constant 5.000000e-01 : f32
    %174 = vector.broadcast %cst_58 : f32 to vector<8x32xf32>
    %175 = arith.mulf %174, %173 : vector<8x32xf32>
    %cst_59 = arith.constant 5.000000e-01 : f32
    %176 = vector.broadcast %cst_59 : f32 to vector<8x32xf32>
    %177 = arith.addf %175, %176 : vector<8x32xf32>
    %178 = vector.extract_strided_slice %167 {offsets = [0, 32], sizes = [8, 32], strides = [1, 1]} : vector<8x96xf32> to vector<8x32xf32>
    %179 = vector.extract_strided_slice %166 {offsets = [0, 32], sizes = [8, 32], strides = [1, 1]} : vector<8x96xf32> to vector<8x32xf32>
    %180 = arith.addf %178, %179 : vector<8x32xf32>
    %cst_60 = arith.constant 5.000000e-01 : f32
    %181 = vector.broadcast %cst_60 : f32 to vector<8x32xf32>
    %182 = arith.mulf %181, %180 : vector<8x32xf32>
    %183 = math.tanh %182 : vector<8x32xf32>
    %cst_61 = arith.constant 5.000000e-01 : f32
    %184 = vector.broadcast %cst_61 : f32 to vector<8x32xf32>
    %185 = arith.mulf %184, %183 : vector<8x32xf32>
    %cst_62 = arith.constant 5.000000e-01 : f32
    %186 = vector.broadcast %cst_62 : f32 to vector<8x32xf32>
    %187 = arith.addf %185, %186 : vector<8x32xf32>
    %188 = vector.extract_strided_slice %167 {offsets = [0, 64], sizes = [8, 32], strides = [1, 1]} : vector<8x96xf32> to vector<8x32xf32>
    %189 = vector.extract_strided_slice %166 {offsets = [0, 64], sizes = [8, 32], strides = [1, 1]} : vector<8x96xf32> to vector<8x32xf32>
    %190 = arith.mulf %177, %189 : vector<8x32xf32>
    %191 = arith.addf %188, %190 : vector<8x32xf32>
    %192 = math.tanh %191 : vector<8x32xf32>
    %193 = arith.subf %162, %192 : vector<8x32xf32>
    %194 = arith.mulf %187, %193 : vector<8x32xf32>
    %195 = arith.addf %192, %194 : vector<8x32xf32>
    %196 = arith.addf %163, %195 : vector<8x32xf32>
    %cst_63 = arith.constant dense<0.000000e+00> : vector<8x96xf32>
    %197 = tpu.matmul %195, %28, %cst_63 {dimension_numbers = #tpu.dot_dimension_numbers<[1], [0], [0], [1], [0, 0, 1, 1], [], []>} : vector<8x32xf32>, vector<32x96xf32>, vector<8x96xf32> -> vector<8x96xf32>
    %198 = vector.broadcast %29 : vector<1x96xf32> to vector<8x96xf32>
    %199 = arith.addf %197, %198 : vector<8x96xf32>
    %200 = vector.extract_strided_slice %27 {offsets = [40, 0], sizes = [8, 96], strides = [1, 1]} : vector<64x96xf32> to vector<8x96xf32>
    %201 = vector.extract_strided_slice %200 {offsets = [0, 0], sizes = [8, 32], strides = [1, 1]} : vector<8x96xf32> to vector<8x32xf32>
    %202 = vector.extract_strided_slice %199 {offsets = [0, 0], sizes = [8, 32], strides = [1, 1]} : vector<8x96xf32> to vector<8x32xf32>
    %203 = arith.addf %201, %202 : vector<8x32xf32>
    %cst_64 = arith.constant 5.000000e-01 : f32
    %204 = vector.broadcast %cst_64 : f32 to vector<8x32xf32>
    %205 = arith.mulf %204, %203 : vector<8x32xf32>
    %206 = math.tanh %205 : vector<8x32xf32>
    %cst_65 = arith.constant 5.000000e-01 : f32
    %207 = vector.broadcast %cst_65 : f32 to vector<8x32xf32>
    %208 = arith.mulf %207, %206 : vector<8x32xf32>
    %cst_66 = arith.constant 5.000000e-01 : f32
    %209 = vector.broadcast %cst_66 : f32 to vector<8x32xf32>
    %210 = arith.addf %208, %209 : vector<8x32xf32>
    %211 = vector.extract_strided_slice %200 {offsets = [0, 32], sizes = [8, 32], strides = [1, 1]} : vector<8x96xf32> to vector<8x32xf32>
    %212 = vector.extract_strided_slice %199 {offsets = [0, 32], sizes = [8, 32], strides = [1, 1]} : vector<8x96xf32> to vector<8x32xf32>
    %213 = arith.addf %211, %212 : vector<8x32xf32>
    %cst_67 = arith.constant 5.000000e-01 : f32
    %214 = vector.broadcast %cst_67 : f32 to vector<8x32xf32>
    %215 = arith.mulf %214, %213 : vector<8x32xf32>
    %216 = math.tanh %215 : vector<8x32xf32>
    %cst_68 = arith.constant 5.000000e-01 : f32
    %217 = vector.broadcast %cst_68 : f32 to vector<8x32xf32>
    %218 = arith.mulf %217, %216 : vector<8x32xf32>
    %cst_69 = arith.constant 5.000000e-01 : f32
    %219 = vector.broadcast %cst_69 : f32 to vector<8x32xf32>
    %220 = arith.addf %218, %219 : vector<8x32xf32>
    %221 = vector.extract_strided_slice %200 {offsets = [0, 64], sizes = [8, 32], strides = [1, 1]} : vector<8x96xf32> to vector<8x32xf32>
    %222 = vector.extract_strided_slice %199 {offsets = [0, 64], sizes = [8, 32], strides = [1, 1]} : vector<8x96xf32> to vector<8x32xf32>
    %223 = arith.mulf %210, %222 : vector<8x32xf32>
    %224 = arith.addf %221, %223 : vector<8x32xf32>
    %225 = math.tanh %224 : vector<8x32xf32>
    %226 = arith.subf %195, %225 : vector<8x32xf32>
    %227 = arith.mulf %220, %226 : vector<8x32xf32>
    %228 = arith.addf %225, %227 : vector<8x32xf32>
    %229 = arith.addf %196, %228 : vector<8x32xf32>
    %cst_70 = arith.constant dense<0.000000e+00> : vector<8x96xf32>
    %230 = tpu.matmul %228, %28, %cst_70 {dimension_numbers = #tpu.dot_dimension_numbers<[1], [0], [0], [1], [0, 0, 1, 1], [], []>} : vector<8x32xf32>, vector<32x96xf32>, vector<8x96xf32> -> vector<8x96xf32>
    %231 = vector.broadcast %29 : vector<1x96xf32> to vector<8x96xf32>
    %232 = arith.addf %230, %231 : vector<8x96xf32>
    %233 = vector.extract_strided_slice %27 {offsets = [48, 0], sizes = [8, 96], strides = [1, 1]} : vector<64x96xf32> to vector<8x96xf32>
    %234 = vector.extract_strided_slice %233 {offsets = [0, 0], sizes = [8, 32], strides = [1, 1]} : vector<8x96xf32> to vector<8x32xf32>
    %235 = vector.extract_strided_slice %232 {offsets = [0, 0], sizes = [8, 32], strides = [1, 1]} : vector<8x96xf32> to vector<8x32xf32>
    %236 = arith.addf %234, %235 : vector<8x32xf32>
    %cst_71 = arith.constant 5.000000e-01 : f32
    %237 = vector.broadcast %cst_71 : f32 to vector<8x32xf32>
    %238 = arith.mulf %237, %236 : vector<8x32xf32>
    %239 = math.tanh %238 : vector<8x32xf32>
    %cst_72 = arith.constant 5.000000e-01 : f32
    %240 = vector.broadcast %cst_72 : f32 to vector<8x32xf32>
    %241 = arith.mulf %240, %239 : vector<8x32xf32>
    %cst_73 = arith.constant 5.000000e-01 : f32
    %242 = vector.broadcast %cst_73 : f32 to vector<8x32xf32>
    %243 = arith.addf %241, %242 : vector<8x32xf32>
    %244 = vector.extract_strided_slice %233 {offsets = [0, 32], sizes = [8, 32], strides = [1, 1]} : vector<8x96xf32> to vector<8x32xf32>
    %245 = vector.extract_strided_slice %232 {offsets = [0, 32], sizes = [8, 32], strides = [1, 1]} : vector<8x96xf32> to vector<8x32xf32>
    %246 = arith.addf %244, %245 : vector<8x32xf32>
    %cst_74 = arith.constant 5.000000e-01 : f32
    %247 = vector.broadcast %cst_74 : f32 to vector<8x32xf32>
    %248 = arith.mulf %247, %246 : vector<8x32xf32>
    %249 = math.tanh %248 : vector<8x32xf32>
    %cst_75 = arith.constant 5.000000e-01 : f32
    %250 = vector.broadcast %cst_75 : f32 to vector<8x32xf32>
    %251 = arith.mulf %250, %249 : vector<8x32xf32>
    %cst_76 = arith.constant 5.000000e-01 : f32
    %252 = vector.broadcast %cst_76 : f32 to vector<8x32xf32>
    %253 = arith.addf %251, %252 : vector<8x32xf32>
    %254 = vector.extract_strided_slice %233 {offsets = [0, 64], sizes = [8, 32], strides = [1, 1]} : vector<8x96xf32> to vector<8x32xf32>
    %255 = vector.extract_strided_slice %232 {offsets = [0, 64], sizes = [8, 32], strides = [1, 1]} : vector<8x96xf32> to vector<8x32xf32>
    %256 = arith.mulf %243, %255 : vector<8x32xf32>
    %257 = arith.addf %254, %256 : vector<8x32xf32>
    %258 = math.tanh %257 : vector<8x32xf32>
    %259 = arith.subf %228, %258 : vector<8x32xf32>
    %260 = arith.mulf %253, %259 : vector<8x32xf32>
    %261 = arith.addf %258, %260 : vector<8x32xf32>
    %262 = arith.addf %229, %261 : vector<8x32xf32>
    %cst_77 = arith.constant dense<0.000000e+00> : vector<8x96xf32>
    %263 = tpu.matmul %261, %28, %cst_77 {dimension_numbers = #tpu.dot_dimension_numbers<[1], [0], [0], [1], [0, 0, 1, 1], [], []>} : vector<8x32xf32>, vector<32x96xf32>, vector<8x96xf32> -> vector<8x96xf32>
    %264 = vector.broadcast %29 : vector<1x96xf32> to vector<8x96xf32>
    %265 = arith.addf %263, %264 : vector<8x96xf32>
    %266 = vector.extract_strided_slice %27 {offsets = [56, 0], sizes = [8, 96], strides = [1, 1]} : vector<64x96xf32> to vector<8x96xf32>
    %267 = vector.extract_strided_slice %266 {offsets = [0, 0], sizes = [8, 32], strides = [1, 1]} : vector<8x96xf32> to vector<8x32xf32>
    %268 = vector.extract_strided_slice %265 {offsets = [0, 0], sizes = [8, 32], strides = [1, 1]} : vector<8x96xf32> to vector<8x32xf32>
    %269 = arith.addf %267, %268 : vector<8x32xf32>
    %cst_78 = arith.constant 5.000000e-01 : f32
    %270 = vector.broadcast %cst_78 : f32 to vector<8x32xf32>
    %271 = arith.mulf %270, %269 : vector<8x32xf32>
    %272 = math.tanh %271 : vector<8x32xf32>
    %cst_79 = arith.constant 5.000000e-01 : f32
    %273 = vector.broadcast %cst_79 : f32 to vector<8x32xf32>
    %274 = arith.mulf %273, %272 : vector<8x32xf32>
    %cst_80 = arith.constant 5.000000e-01 : f32
    %275 = vector.broadcast %cst_80 : f32 to vector<8x32xf32>
    %276 = arith.addf %274, %275 : vector<8x32xf32>
    %277 = vector.extract_strided_slice %266 {offsets = [0, 32], sizes = [8, 32], strides = [1, 1]} : vector<8x96xf32> to vector<8x32xf32>
    %278 = vector.extract_strided_slice %265 {offsets = [0, 32], sizes = [8, 32], strides = [1, 1]} : vector<8x96xf32> to vector<8x32xf32>
    %279 = arith.addf %277, %278 : vector<8x32xf32>
    %cst_81 = arith.constant 5.000000e-01 : f32
    %280 = vector.broadcast %cst_81 : f32 to vector<8x32xf32>
    %281 = arith.mulf %280, %279 : vector<8x32xf32>
    %282 = math.tanh %281 : vector<8x32xf32>
    %cst_82 = arith.constant 5.000000e-01 : f32
    %283 = vector.broadcast %cst_82 : f32 to vector<8x32xf32>
    %284 = arith.mulf %283, %282 : vector<8x32xf32>
    %cst_83 = arith.constant 5.000000e-01 : f32
    %285 = vector.broadcast %cst_83 : f32 to vector<8x32xf32>
    %286 = arith.addf %284, %285 : vector<8x32xf32>
    %287 = vector.extract_strided_slice %266 {offsets = [0, 64], sizes = [8, 32], strides = [1, 1]} : vector<8x96xf32> to vector<8x32xf32>
    %288 = vector.extract_strided_slice %265 {offsets = [0, 64], sizes = [8, 32], strides = [1, 1]} : vector<8x96xf32> to vector<8x32xf32>
    %289 = arith.mulf %276, %288 : vector<8x32xf32>
    %290 = arith.addf %287, %289 : vector<8x32xf32>
    %291 = math.tanh %290 : vector<8x32xf32>
    %292 = arith.subf %261, %291 : vector<8x32xf32>
    %293 = arith.mulf %286, %292 : vector<8x32xf32>
    %294 = arith.addf %291, %293 : vector<8x32xf32>
    %295 = arith.addf %262, %294 : vector<8x32xf32>
    %c0_84 = arith.constant 0 : index
    %c0_85 = arith.constant 0 : index
    %296 = vector.load %arg12[%c0_84, %c0_85] : memref<32x128xf32, #tpu.memory_space<vmem>>, vector<32x128xf32>
    %cst_86 = arith.constant dense<0.000000e+00> : vector<8x128xf32>
    %297 = tpu.matmul %295, %296, %cst_86 {dimension_numbers = #tpu.dot_dimension_numbers<[1], [0], [0], [1], [0, 0, 1, 1], [], []>} : vector<8x32xf32>, vector<32x128xf32>, vector<8x128xf32> -> vector<8x128xf32>
    %c0_87 = arith.constant 0 : index
    %c0_88 = arith.constant 0 : index
    %298 = vector.load %arg13[%c0_87, %c0_88] : memref<1x128xf32, #tpu.memory_space<vmem>>, vector<1x128xf32>
    %299 = vector.broadcast %298 : vector<1x128xf32> to vector<8x128xf32>
    %300 = arith.addf %297, %299 : vector<8x128xf32>
    %c0_89 = arith.constant 0 : index
    %c0_90 = arith.constant 0 : index
    %301 = vector.load %arg15[%c0_89, %c0_90] : memref<8x128xf32, #tpu.memory_space<vmem>>, vector<8x128xf32>
    tpu.vector_store %arg15[%c0_89, %c0_90], %300 {strides = array<i32>} : memref<8x128xf32, #tpu.memory_space<vmem>>, vector<8x128xf32>,
    %c0_91 = arith.constant 0 : index
    %c0_92 = arith.constant 0 : index
    %302 = vector.load %arg14[%c0_91, %c0_92] : memref<32x128xf32, #tpu.memory_space<vmem>>, vector<32x128xf32>
    %cst_93 = arith.constant dense<0.000000e+00> : vector<8x128xf32>
    %303 = tpu.matmul %294, %302, %cst_93 {dimension_numbers = #tpu.dot_dimension_numbers<[1], [0], [0], [1], [0, 0, 1, 1], [], []>} : vector<8x32xf32>, vector<32x128xf32>, vector<8x128xf32> -> vector<8x128xf32>
    %c0_94 = arith.constant 0 : index
    %c0_95 = arith.constant 0 : index
    %304 = vector.load %arg16[%c0_94, %c0_95] : memref<8x128xf32, #tpu.memory_space<vmem>>, vector<8x128xf32>
    tpu.vector_store %arg16[%c0_94, %c0_95], %303 {strides = array<i32>} : memref<8x128xf32, #tpu.memory_space<vmem>>, vector<8x128xf32>,
    return
  }
}

</mosaic_0001>

<llo_original>
// kernel: vanilla_decoder_forward.1
$region0: #{vanilla_decoder_forward.1}
  #allocation0 [shape = 'u32[]', space=smem, size = 0x4, offset = 0x4, fixed_abs, tag = 'smem constant byte address 0x4 - core index']
  #allocation1 [shape = 'u32[144,128]{1,0:T(1,128)}', space=vmem, size = 0x12000, scoped, tag = 'internal scratch']
  #allocation2 [shape = 'f32[1,1]{1,0:T(1,128)S(6)}', space=smem, size = 0x200, scoped, tag = 'scoped memory for vanilla_decoder_forward.1']
  #allocation3 [shape = 'f32[1,1]{1,0:T(1,128)S(6)}', space=smem, size = 0x200, scoped, tag = 'scoped memory for vanilla_decoder_forward.1']
  %s0 = inlined_call_operand.vmem [shape: f32[64,32], index: 0, kind: input, shape index: {}]
  %s1 = inlined_call_operand.vmem [shape: f32[8,32], index: 1, kind: input, shape index: {}]
  %s2 = inlined_call_operand.vmem [shape: f32[32,32], index: 2, kind: input, shape index: {}]
  %s3 = inlined_call_operand.vmem [shape: f32[1,32], index: 3, kind: input, shape index: {}]
  %s4 = inlined_call_operand.vmem [shape: f32[32,32], index: 4, kind: input, shape index: {}]
  %s5 = inlined_call_operand.hbm [shape: f32[1,32], index: 5, kind: input, shape index: {}]
  %s6 = inlined_call_operand.<no memory space> [shape: f32[1,1], index: 6, kind: input, shape index: {}]
  %s7 = inlined_call_operand.<no memory space> [shape: f32[1,1], index: 7, kind: input, shape index: {}]
  %s8 = inlined_call_operand.vmem [shape: f32[32,96], index: 8, kind: input, shape index: {}]
  %s9 = inlined_call_operand.vmem [shape: f32[1,96], index: 9, kind: input, shape index: {}]
  %s10 = inlined_call_operand.hbm [shape: f32[32,96], index: 10, kind: input, shape index: {}]
  %s11 = inlined_call_operand.vmem [shape: f32[1,96], index: 11, kind: input, shape index: {}]
  %s12 = inlined_call_operand.hbm [shape: f32[32,128], index: 12, kind: input, shape index: {}]
  %s13 = inlined_call_operand.vmem [shape: f32[1,128], index: 13, kind: input, shape index: {}]
  %s14 = inlined_call_operand.vmem [shape: f32[32,128], index: 14, kind: input, shape index: {}]
  %s15 = inlined_call_operand.vmem [shape: f32[8,128], index: 15, kind: output, shape index: {0}]
  %s16 = inlined_call_operand.vmem [shape: f32[8,128], index: 16, kind: output, shape index: {1}]
  %17 = xla_tuple %s15, %s16
  %s18 = sld [smem:[#allocation0]]
  $region90: #{vanilla_decoder_forward.1} parent=0
    _
  %s20 = ssub.s32 1, %s18
  %s21 = scalar_select 0, %s20, %s18
  %22 = sst [smem:[#allocation2]] %s6
  %23 = sst [smem:[#allocation3]] %s7
  $region1: #{vanilla_decoder_forward.1} parent=0
    #allocation4 [shape = 'u8[512]{0}', space=vmem, size = 0x400, scoped, tag = 'input window, operand 5, single buffered']
    #allocation5 [shape = 's32[1]{0}', space=sflag, size = 0x4, scoped, tag = 'scoped memory for vanilla_decoder_forward.1']
    #allocation6 [shape = 'u8[16384]{0}', space=vmem, size = 0x4000, scoped, tag = 'input window, operand 10, single buffered']
    #allocation7 [shape = 's32[1]{0}', space=sflag, size = 0x4, scoped, tag = 'scoped memory for vanilla_decoder_forward.1']
    #allocation8 [shape = 'u8[16384]{0}', space=vmem, size = 0x4000, scoped, tag = 'input window, operand 12, single buffered']
    %24 = vsyncpa [#allocation5], 0
    %25 = vsyncpa [#allocation7], 0
    // Predicated region
    $region2: #{vanilla_decoder_forward.1} parent=1 // pred_check
      _
    $region3: #{vanilla_decoder_forward.1} parent=1 // pred_check_branch
      %27 = sbr.rel (0) target = $region5
    $region4: #{vanilla_decoder_forward.1} parent=1 // pred_region
      _
    $region5: #{vanilla_decoder_forward.1} parent=1 // pred_fallthru
      _
    // Predicated region
    $region6: #{vanilla_decoder_forward.1} parent=1 // pred_check
      _
    $region7: #{vanilla_decoder_forward.1} parent=1 // pred_check_branch
      %29 = sbr.rel (0) target = $region9
    $region8: #{vanilla_decoder_forward.1} parent=1 // pred_region
      _
    $region9: #{vanilla_decoder_forward.1} parent=1 // pred_fallthru
      _
    // Predicated region
    $region10: #{vanilla_decoder_forward.1} parent=1 // pred_check
      _
    $region11: #{vanilla_decoder_forward.1} parent=1 // pred_check_branch
      %31 = sbr.rel (0) target = $region13
    $region12: #{vanilla_decoder_forward.1} parent=1 // pred_region
      _
    $region13: #{vanilla_decoder_forward.1} parent=1 // pred_fallthru
      _
    // Predicated region
    $region14: #{vanilla_decoder_forward.1} parent=1 // pred_check
      _
    $region15: #{vanilla_decoder_forward.1} parent=1 // pred_check_branch
      %33 = sbr.rel (0) target = $region17
    $region16: #{vanilla_decoder_forward.1} parent=1 // pred_region
      _
    $region17: #{vanilla_decoder_forward.1} parent=1 // pred_fallthru
      _
    // Predicated region
    $region18: #{vanilla_decoder_forward.1} parent=1 // pred_check
      _
    $region19: #{vanilla_decoder_forward.1} parent=1 // pred_check_branch
      %35 = sbr.rel (0) target = $region21
    $region20: #{vanilla_decoder_forward.1} parent=1 // pred_region
      _
    $region21: #{vanilla_decoder_forward.1} parent=1 // pred_fallthru
      _
    // Predicated region
    $region22: #{vanilla_decoder_forward.1} parent=1 // pred_check
      _
    $region23: #{vanilla_decoder_forward.1} parent=1 // pred_check_branch
      %37 = sbr.rel (0) target = $region25
    $region24: #{vanilla_decoder_forward.1} parent=1 // pred_region
      %s39 = ssub.s32 16, 16
      %40 = vsyncadd [#allocation5], %s39
      %s42 = sshll.u32 [#allocation4], 4
      %s43 = int_to_ptr.vmem [resolvable:$true] %s42
      %45 = dma.hbm_to_vmem [thread:$0]  %s5, 16, %s43, [#allocation5]
    $region25: #{vanilla_decoder_forward.1} parent=1 // pred_fallthru
      _
    // Predicated region
    $region26: #{vanilla_decoder_forward.1} parent=1 // pred_check
      _
    $region27: #{vanilla_decoder_forward.1} parent=1 // pred_check_branch
      %47 = sbr.rel (0) target = $region29
    $region28: #{vanilla_decoder_forward.1} parent=1 // pred_region
      _
    $region29: #{vanilla_decoder_forward.1} parent=1 // pred_fallthru
      _
    // Predicated region
    $region30: #{vanilla_decoder_forward.1} parent=1 // pred_check
      _
    $region31: #{vanilla_decoder_forward.1} parent=1 // pred_check_branch
      %49 = sbr.rel (0) target = $region33
    $region32: #{vanilla_decoder_forward.1} parent=1 // pred_region
      _
    $region33: #{vanilla_decoder_forward.1} parent=1 // pred_fallthru
      _
    // Predicated region
    $region34: #{vanilla_decoder_forward.1} parent=1 // pred_check
      _
    $region35: #{vanilla_decoder_forward.1} parent=1 // pred_check_branch
      %51 = sbr.rel (0) target = $region37
    $region36: #{vanilla_decoder_forward.1} parent=1 // pred_region
      _
    $region37: #{vanilla_decoder_forward.1} parent=1 // pred_fallthru
      _
    // Predicated region
    $region38: #{vanilla_decoder_forward.1} parent=1 // pred_check
      _
    $region39: #{vanilla_decoder_forward.1} parent=1 // pred_check_branch
      %53 = sbr.rel (0) target = $region41
    $region40: #{vanilla_decoder_forward.1} parent=1 // pred_region
      _
    $region41: #{vanilla_decoder_forward.1} parent=1 // pred_fallthru
      _
    // Predicated region
    $region42: #{vanilla_decoder_forward.1} parent=1 // pred_check
      _
    $region43: #{vanilla_decoder_forward.1} parent=1 // pred_check_branch
      %55 = sbr.rel (0) target = $region45
    $region44: #{vanilla_decoder_forward.1} parent=1 // pred_region
      %s57 = ssub.s32 512, 512
      %58 = vsyncadd [#allocation7], %s57
      %s59 = sshll.u32 [#allocation6], 4
      %s60 = int_to_ptr.vmem [resolvable:$true] %s59
      %65 = dma.hbm_to_vmem [thread:$0]  %s10, 512, %s60, [#allocation7], 128, 128, 8
    $region45: #{vanilla_decoder_forward.1} parent=1 // pred_fallthru
      _
    // Predicated region
    $region46: #{vanilla_decoder_forward.1} parent=1 // pred_check
      _
    $region47: #{vanilla_decoder_forward.1} parent=1 // pred_check_branch
      %67 = sbr.rel (0) target = $region49
    $region48: #{vanilla_decoder_forward.1} parent=1 // pred_region
      _
    $region49: #{vanilla_decoder_forward.1} parent=1 // pred_fallthru
      _
    // Predicated region
    $region50: #{vanilla_decoder_forward.1} parent=1 // pred_check
      _
    $region51: #{vanilla_decoder_forward.1} parent=1 // pred_check_branch
      %69 = sbr.rel (0) target = $region53
    $region52: #{vanilla_decoder_forward.1} parent=1 // pred_region
      %s71 = ssub.s32 512, 512
      %72 = vsyncadd [#allocation7], %s71
      %s73 = sshll.u32 [#allocation8], 4
      %s74 = int_to_ptr.vmem [resolvable:$true] %s73
      %79 = dma.hbm_to_vmem [thread:$0]  %s12, 512, %s74, [#allocation7], 128, 128, 8
    $region53: #{vanilla_decoder_forward.1} parent=1 // pred_fallthru
      _
    // Predicated region
    $region54: #{vanilla_decoder_forward.1} parent=1 // pred_check
      _
    $region55: #{vanilla_decoder_forward.1} parent=1 // pred_check_branch
      %81 = sbr.rel (0) target = $region57
    $region56: #{vanilla_decoder_forward.1} parent=1 // pred_region
      _
    $region57: #{vanilla_decoder_forward.1} parent=1 // pred_fallthru
      _
    // Predicated region
    $region58: #{vanilla_decoder_forward.1} parent=1 // pred_check
      _
    $region59: #{vanilla_decoder_forward.1} parent=1 // pred_check_branch
      %83 = sbr.rel (0) target = $region61
    $region60: #{vanilla_decoder_forward.1} parent=1 // pred_region
      _
    $region61: #{vanilla_decoder_forward.1} parent=1 // pred_fallthru
      _
    // Predicated region
    $region62: #{vanilla_decoder_forward.1} parent=1 // pred_check
      _
    $region63: #{vanilla_decoder_forward.1} parent=1 // pred_check_branch
      %85 = sbr.rel (0) target = $region65
    $region64: #{vanilla_decoder_forward.1} parent=1 // pred_region
      %86 = dma.done [#allocation5], 16
    $region65: #{vanilla_decoder_forward.1} parent=1 // pred_fallthru
      _
    // Predicated region
    $region66: #{vanilla_decoder_forward.1} parent=1 // pred_check
      _
    $region67: #{vanilla_decoder_forward.1} parent=1 // pred_check_branch
      %88 = sbr.rel (0) target = $region69
    $region68: #{vanilla_decoder_forward.1} parent=1 // pred_region
      %89 = dma.done [#allocation7], 512
    $region69: #{vanilla_decoder_forward.1} parent=1 // pred_fallthru
      _
    // Predicated region
    $region70: #{vanilla_decoder_forward.1} parent=1 // pred_check
      _
    $region71: #{vanilla_decoder_forward.1} parent=1 // pred_check_branch
      %91 = sbr.rel (0) target = $region73
    $region72: #{vanilla_decoder_forward.1} parent=1 // pred_region
      %92 = dma.done [#allocation7], 512
    $region73: #{vanilla_decoder_forward.1} parent=1 // pred_fallthru
      _
    %s93 = sld [smem:[#allocation2]]
    %s94 = sld [smem:[#allocation3]]
    %v95 = vld [vmem:[%s0] sm:$0xff]
    %v96 = vld [vmem:[%s0 + $0x8] sm:$0xff]
    %v97 = vld [vmem:[%s0 + $0x10] sm:$0xff]
    %v98 = vld [vmem:[%s0 + $0x18] sm:$0xff]
    %v99 = vld [vmem:[%s0 + $0x20] sm:$0xff]
    %v100 = vld [vmem:[%s0 + $0x28] sm:$0xff]
    %v101 = vld [vmem:[%s0 + $0x30] sm:$0xff]
    %v102 = vld [vmem:[%s0 + $0x38] sm:$0xff]
    %v103 = vld [vmem:[%s2] sm:$0xff]
    %v104 = vld [vmem:[%s2 + $0x8] sm:$0xff]
    %v105 = vld [vmem:[%s2 + $0x10] sm:$0xff]
    %v106 = vld [vmem:[%s2 + $0x18] sm:$0xff]
    %v107 = vld [vmem:[%s3] sm:$0x1]
    %v109 = vlaneseq
    %v110 = vshrl.u32 %v109, 7
    %v111 = vsub.s32 0, %v110
    %v112 = vrot.slane %v107, %v111
    %vm114 = vcmask 261120
    %v116 = vsel %vm114, %v95, 0
    %v119 = vsel %vm114, %v96, 0
    %v122 = vsel %vm114, %v97, 0
    %v125 = vsel %vm114, %v98, 0
    %v128 = vsel %vm114, %v99, 0
    %v131 = vsel %vm114, %v100, 0
    %v134 = vsel %vm114, %v101, 0
    %v137 = vsel %vm114, %v102, 0
    %139 = vmatprep.subr.mxu0 0.0
    %140 = vmatpush1.msra.mxu0 0.0
    %141 = vmatprep.subr.mxu0 0.0
    %142 = vmatpush1.msra.mxu0 0.0
    %143 = vmatprep.subr.mxu0 0.0
    %144 = vmatpush1.msra.mxu0 0.0
    %145 = vmatprep.subr.mxu0 0.0
    %146 = vmatpush1.msra.mxu0 0.0
    %147 = vmatprep.subr.mxu0 0.0
    %148 = vmatpush1.msra.mxu0 0.0
    %149 = vmatprep.subr.mxu0 0.0
    %150 = vmatpush1.msra.mxu0 0.0
    %151 = vmatprep.subr.mxu0 0.0
    %152 = vmatpush1.msra.mxu0 0.0
    %153 = vmatprep.subr.mxu0 0.0
    %154 = vmatpush1.msra.mxu0 0.0
    %155 = vmatprep.subr.mxu0 0.0
    %156 = vmatpush1.msra.mxu0 0.0
    %157 = vmatprep.subr.mxu0 0.0
    %158 = vmatpush1.msra.mxu0 0.0
    %159 = vmatprep.subr.mxu0 0.0
    %160 = vmatpush1.msra.mxu0 0.0
    %161 = vmatprep.subr.mxu0 0.0
    %162 = vmatpush1.msra.mxu0 0.0
    %163 = vmatprep.subr.mxu0 0.0
    %164 = vmatpush1.msra.mxu0 %v106
    %165 = vmatprep.subr.mxu0 0.0
    %166 = vmatpush1.msra.mxu0 %v105
    %167 = vmatprep.subr.mxu0 0.0
    %168 = vmatpush1.msra.mxu0 %v104
    %169 = vmatprep.subr.mxu0 0.0
    %170 = vmatpush1.msra.mxu0 %v103
    %171 = vmatprep.subr.mxu0 0.0
    %172 = vmatpush2.msra.mxu0 0.0
    %173 = vmatprep.subr.mxu0 0.0
    %174 = vmatpush2.msra.mxu0 0.0
    %175 = vmatprep.subr.mxu0 0.0
    %176 = vmatpush2.msra.mxu0 0.0
    %177 = vmatprep.subr.mxu0 0.0
    %178 = vmatpush2.msra.mxu0 0.0
    %179 = vmatprep.subr.mxu0 0.0
    %180 = vmatpush2.msra.mxu0 0.0
    %181 = vmatprep.subr.mxu0 0.0
    %182 = vmatpush2.msra.mxu0 0.0
    %183 = vmatprep.subr.mxu0 0.0
    %184 = vmatpush2.msra.mxu0 0.0
    %185 = vmatprep.subr.mxu0 0.0
    %186 = vmatpush2.msra.mxu0 0.0
    %187 = vmatprep.subr.mxu0 0.0
    %188 = vmatpush2.msra.mxu0 0.0
    %189 = vmatprep.subr.mxu0 0.0
    %190 = vmatpush2.msra.mxu0 0.0
    %191 = vmatprep.subr.mxu0 0.0
    %192 = vmatpush2.msra.mxu0 0.0
    %193 = vmatprep.subr.mxu0 0.0
    %194 = vmatpush2.msra.mxu0 0.0
    %195 = vmatprep.subr.mxu0 0.0
    %196 = vmatpush2.msra.mxu0 0.0
    %197 = vmatprep.subr.mxu0 0.0
    %198 = vmatpush2.msra.mxu0 0.0
    %199 = vmatprep.subr.mxu0 0.0
    %200 = vmatpush2.msra.mxu0 0.0
    %201 = vmatprep.subr.mxu0 0.0
    %202 = vmatpush2.msra.mxu0 0.0
    %203 = vmatprep.mubr.f32.mxu0 0.0
    %204 = vmatmul.mubr.f32.gmra.mxu0 %v116
    %v205 = vpop.f32.mrf.mxu0
    %v206 = vadd.f32 %v112, %v205
    %v207 = vpop.f32.mrf.mxu0
    %208 = vmatprep.mubr.f32.mxu0 0.0
    %209 = vmatmul.mubr.f32.gmra.mxu0 %v119
    %v210 = vpop.f32.mrf.mxu0
    %v211 = vadd.f32 %v112, %v210
    %v212 = vpop.f32.mrf.mxu0
    %213 = vmatprep.mubr.f32.mxu0 0.0
    %214 = vmatmul.mubr.f32.gmra.mxu0 %v122
    %v215 = vpop.f32.mrf.mxu0
    %v216 = vadd.f32 %v112, %v215
    %v217 = vpop.f32.mrf.mxu0
    %218 = vmatprep.mubr.f32.mxu0 0.0
    %219 = vmatmul.mubr.f32.gmra.mxu0 %v125
    %v220 = vpop.f32.mrf.mxu0
    %v221 = vadd.f32 %v112, %v220
    %v222 = vpop.f32.mrf.mxu0
    %223 = vmatprep.mubr.f32.mxu0 0.0
    %224 = vmatmul.mubr.f32.gmra.mxu0 %v128
    %v225 = vpop.f32.mrf.mxu0
    %v226 = vadd.f32 %v112, %v225
    %v227 = vpop.f32.mrf.mxu0
    %228 = vmatprep.mubr.f32.mxu0 0.0
    %229 = vmatmul.mubr.f32.gmra.mxu0 %v131
    %v230 = vpop.f32.mrf.mxu0
    %v231 = vadd.f32 %v112, %v230
    %v232 = vpop.f32.mrf.mxu0
    %233 = vmatprep.mubr.f32.mxu0 0.0
    %234 = vmatmul.mubr.f32.gmra.mxu0 %v134
    %v235 = vpop.f32.mrf.mxu0
    %v236 = vadd.f32 %v112, %v235
    %v237 = vpop.f32.mrf.mxu0
    %238 = vmatprep.mubr.f32.mxu0 0.0
    %239 = vmatmul.mubr.f32.gmra.mxu0 %v137
    %v240 = vpop.f32.mrf.mxu0
    %v241 = vadd.f32 %v112, %v240
    %v242 = vpop.f32.mrf.mxu0
    %243 = vdwg.mxu0
    %vm244 = vcmp.ge.f32.partialorder %v206, 0.0
    %vm245 = vcmp.ge.f32.partialorder %v211, 0.0
    %vm246 = vcmp.ge.f32.partialorder %v216, 0.0
    %vm247 = vcmp.ge.f32.partialorder %v221, 0.0
    %vm248 = vcmp.ge.f32.partialorder %v226, 0.0
    %vm249 = vcmp.ge.f32.partialorder %v231, 0.0
    %vm250 = vcmp.ge.f32.partialorder %v236, 0.0
    %vm251 = vcmp.ge.f32.partialorder %v241, 0.0
    %v252 = vstv %s93
    %v253 = vmul.f32 %v252, %v206
    %v254 = vmul.f32 %v252, %v211
    %v255 = vmul.f32 %v252, %v216
    %v256 = vmul.f32 %v252, %v221
    %v257 = vmul.f32 %v252, %v226
    %v258 = vmul.f32 %v252, %v231
    %v259 = vmul.f32 %v252, %v236
    %v260 = vmul.f32 %v252, %v241
    %v261 = vsel %vm244, %v206, %v253
    %v262 = vsel %vm245, %v211, %v254
    %v263 = vsel %vm246, %v216, %v255
    %v264 = vsel %vm247, %v221, %v256
    %v265 = vsel %vm248, %v226, %v257
    %v266 = vsel %vm249, %v231, %v258
    %v267 = vsel %vm250, %v236, %v259
    %v268 = vsel %vm251, %v241, %v260
    %v269 = vld [vmem:[%s4] sm:$0xff]
    %v270 = vld [vmem:[%s4 + $0x8] sm:$0xff]
    %v271 = vld [vmem:[%s4 + $0x10] sm:$0xff]
    %v272 = vld [vmem:[%s4 + $0x18] sm:$0xff]
    %v273 = vld [vmem:[#allocation4] sm:$0x1]
    %v275 = vlaneseq
    %v276 = vshrl.u32 %v275, 7
    %v277 = vsub.s32 0, %v276
    %v278 = vrot.slane %v273, %v277
    %v281 = vsel %vm114, %v261, 0
    %v284 = vsel %vm114, %v262, 0
    %v287 = vsel %vm114, %v263, 0
    %v290 = vsel %vm114, %v264, 0
    %v293 = vsel %vm114, %v265, 0
    %v296 = vsel %vm114, %v266, 0
    %v299 = vsel %vm114, %v267, 0
    %v302 = vsel %vm114, %v268, 0
    %304 = vmatprep.subr.mxu0 0.0
    %305 = vmatpush1.msra.mxu0 0.0
    %306 = vmatprep.subr.mxu0 0.0
    %307 = vmatpush1.msra.mxu0 0.0
    %308 = vmatprep.subr.mxu0 0.0
    %309 = vmatpush1.msra.mxu0 0.0
    %310 = vmatprep.subr.mxu0 0.0
    %311 = vmatpush1.msra.mxu0 0.0
    %312 = vmatprep.subr.mxu0 0.0
    %313 = vmatpush1.msra.mxu0 0.0
    %314 = vmatprep.subr.mxu0 0.0
    %315 = vmatpush1.msra.mxu0 0.0
    %316 = vmatprep.subr.mxu0 0.0
    %317 = vmatpush1.msra.mxu0 0.0
    %318 = vmatprep.subr.mxu0 0.0
    %319 = vmatpush1.msra.mxu0 0.0
    %320 = vmatprep.subr.mxu0 0.0
    %321 = vmatpush1.msra.mxu0 0.0
    %322 = vmatprep.subr.mxu0 0.0
    %323 = vmatpush1.msra.mxu0 0.0
    %324 = vmatprep.subr.mxu0 0.0
    %325 = vmatpush1.msra.mxu0 0.0
    %326 = vmatprep.subr.mxu0 0.0
    %327 = vmatpush1.msra.mxu0 0.0
    %328 = vmatprep.subr.mxu0 0.0
    %329 = vmatpush1.msra.mxu0 %v272
    %330 = vmatprep.subr.mxu0 0.0
    %331 = vmatpush1.msra.mxu0 %v271
    %332 = vmatprep.subr.mxu0 0.0
    %333 = vmatpush1.msra.mxu0 %v270
    %334 = vmatprep.subr.mxu0 0.0
    %335 = vmatpush1.msra.mxu0 %v269
    %336 = vmatprep.subr.mxu0 0.0
    %337 = vmatpush2.msra.mxu0 0.0
    %338 = vmatprep.subr.mxu0 0.0
    %339 = vmatpush2.msra.mxu0 0.0
    %340 = vmatprep.subr.mxu0 0.0
    %341 = vmatpush2.msra.mxu0 0.0
    %342 = vmatprep.subr.mxu0 0.0
    %343 = vmatpush2.msra.mxu0 0.0
    %344 = vmatprep.subr.mxu0 0.0
    %345 = vmatpush2.msra.mxu0 0.0
    %346 = vmatprep.subr.mxu0 0.0
    %347 = vmatpush2.msra.mxu0 0.0
    %348 = vmatprep.subr.mxu0 0.0
    %349 = vmatpush2.msra.mxu0 0.0
    %350 = vmatprep.subr.mxu0 0.0
    %351 = vmatpush2.msra.mxu0 0.0
    %352 = vmatprep.subr.mxu0 0.0
    %353 = vmatpush2.msra.mxu0 0.0
    %354 = vmatprep.subr.mxu0 0.0
    %355 = vmatpush2.msra.mxu0 0.0
    %356 = vmatprep.subr.mxu0 0.0
    %357 = vmatpush2.msra.mxu0 0.0
    %358 = vmatprep.subr.mxu0 0.0
    %359 = vmatpush2.msra.mxu0 0.0
    %360 = vmatprep.subr.mxu0 0.0
    %361 = vmatpush2.msra.mxu0 0.0
    %362 = vmatprep.subr.mxu0 0.0
    %363 = vmatpush2.msra.mxu0 0.0
    %364 = vmatprep.subr.mxu0 0.0
    %365 = vmatpush2.msra.mxu0 0.0
    %366 = vmatprep.subr.mxu0 0.0
    %367 = vmatpush2.msra.mxu0 0.0
    %368 = vmatprep.mubr.f32.mxu0 0.0
    %369 = vmatmul.mubr.f32.gmra.mxu0 %v281
    %v370 = vpop.f32.mrf.mxu0
    %v371 = vadd.f32 %v278, %v370
    %v372 = vpop.f32.mrf.mxu0
    %373 = vmatprep.mubr.f32.mxu0 0.0
    %374 = vmatmul.mubr.f32.gmra.mxu0 %v284
    %v375 = vpop.f32.mrf.mxu0
    %v376 = vadd.f32 %v278, %v375
    %v377 = vpop.f32.mrf.mxu0
    %378 = vmatprep.mubr.f32.mxu0 0.0
    %379 = vmatmul.mubr.f32.gmra.mxu0 %v287
    %v380 = vpop.f32.mrf.mxu0
    %v381 = vadd.f32 %v278, %v380
    %v382 = vpop.f32.mrf.mxu0
    %383 = vmatprep.mubr.f32.mxu0 0.0
    %384 = vmatmul.mubr.f32.gmra.mxu0 %v290
    %v385 = vpop.f32.mrf.mxu0
    %v386 = vadd.f32 %v278, %v385
    %v387 = vpop.f32.mrf.mxu0
    %388 = vmatprep.mubr.f32.mxu0 0.0
    %389 = vmatmul.mubr.f32.gmra.mxu0 %v293
    %v390 = vpop.f32.mrf.mxu0
    %v391 = vadd.f32 %v278, %v390
    %v392 = vpop.f32.mrf.mxu0
    %393 = vmatprep.mubr.f32.mxu0 0.0
    %394 = vmatmul.mubr.f32.gmra.mxu0 %v296
    %v395 = vpop.f32.mrf.mxu0
    %v396 = vadd.f32 %v278, %v395
    %v397 = vpop.f32.mrf.mxu0
    %398 = vmatprep.mubr.f32.mxu0 0.0
    %399 = vmatmul.mubr.f32.gmra.mxu0 %v299
    %v400 = vpop.f32.mrf.mxu0
    %v401 = vadd.f32 %v278, %v400
    %v402 = vpop.f32.mrf.mxu0
    %403 = vmatprep.mubr.f32.mxu0 0.0
    %404 = vmatmul.mubr.f32.gmra.mxu0 %v302
    %v405 = vpop.f32.mrf.mxu0
    %v406 = vadd.f32 %v278, %v405
    %v407 = vpop.f32.mrf.mxu0
    %408 = vdwg.mxu0
    %vm409 = vcmp.ge.f32.partialorder %v371, 0.0
    %vm410 = vcmp.ge.f32.partialorder %v376, 0.0
    %vm411 = vcmp.ge.f32.partialorder %v381, 0.0
    %vm412 = vcmp.ge.f32.partialorder %v386, 0.0
    %vm413 = vcmp.ge.f32.partialorder %v391, 0.0
    %vm414 = vcmp.ge.f32.partialorder %v396, 0.0
    %vm415 = vcmp.ge.f32.partialorder %v401, 0.0
    %vm416 = vcmp.ge.f32.partialorder %v406, 0.0
    %v417 = vstv %s94
    %v418 = vmul.f32 %v417, %v371
    %v419 = vmul.f32 %v417, %v376
    %v420 = vmul.f32 %v417, %v381
    %v421 = vmul.f32 %v417, %v386
    %v422 = vmul.f32 %v417, %v391
    %v423 = vmul.f32 %v417, %v396
    %v424 = vmul.f32 %v417, %v401
    %v425 = vmul.f32 %v417, %v406
    %v426 = vsel %vm409, %v371, %v418
    %v427 = vsel %vm410, %v376, %v419
    %v428 = vsel %vm411, %v381, %v420
    %v429 = vsel %vm412, %v386, %v421
    %v430 = vsel %vm413, %v391, %v422
    %v431 = vsel %vm414, %v396, %v423
    %v432 = vsel %vm415, %v401, %v424
    %v433 = vsel %vm416, %v406, %v425
    %v434 = vld [vmem:[%s8] sm:$0xff]
    %v435 = vld [vmem:[%s8 + $0x8] sm:$0xff]
    %v436 = vld [vmem:[%s8 + $0x10] sm:$0xff]
    %v437 = vld [vmem:[%s8 + $0x18] sm:$0xff]
    %v438 = vld [vmem:[%s9] sm:$0x1]
    %v440 = vlaneseq
    %v441 = vshrl.u32 %v440, 7
    %v442 = vsub.s32 0, %v441
    %v443 = vrot.slane %v438, %v442
    %v446 = vsel %vm114, %v426, 0
    %v449 = vsel %vm114, %v427, 0
    %v452 = vsel %vm114, %v428, 0
    %v455 = vsel %vm114, %v429, 0
    %v458 = vsel %vm114, %v430, 0
    %v461 = vsel %vm114, %v431, 0
    %v464 = vsel %vm114, %v432, 0
    %v467 = vsel %vm114, %v433, 0
    %469 = vmatprep.subr.mxu0 0.0
    %470 = vmatpush1.msra.mxu0 0.0
    %471 = vmatprep.subr.mxu0 0.0
    %472 = vmatpush1.msra.mxu0 0.0
    %473 = vmatprep.subr.mxu0 0.0
    %474 = vmatpush1.msra.mxu0 0.0
    %475 = vmatprep.subr.mxu0 0.0
    %476 = vmatpush1.msra.mxu0 0.0
    %477 = vmatprep.subr.mxu0 0.0
    %478 = vmatpush1.msra.mxu0 0.0
    %479 = vmatprep.subr.mxu0 0.0
    %480 = vmatpush1.msra.mxu0 0.0
    %481 = vmatprep.subr.mxu0 0.0
    %482 = vmatpush1.msra.mxu0 0.0
    %483 = vmatprep.subr.mxu0 0.0
    %484 = vmatpush1.msra.mxu0 0.0
    %485 = vmatprep.subr.mxu0 0.0
    %486 = vmatpush1.msra.mxu0 0.0
    %487 = vmatprep.subr.mxu0 0.0
    %488 = vmatpush1.msra.mxu0 0.0
    %489 = vmatprep.subr.mxu0 0.0
    %490 = vmatpush1.msra.mxu0 0.0
    %491 = vmatprep.subr.mxu0 0.0
    %492 = vmatpush1.msra.mxu0 0.0
    %493 = vmatprep.subr.mxu0 0.0
    %494 = vmatpush1.msra.mxu0 %v437
    %495 = vmatprep.subr.mxu0 0.0
    %496 = vmatpush1.msra.mxu0 %v436
    %497 = vmatprep.subr.mxu0 0.0
    %498 = vmatpush1.msra.mxu0 %v435
    %499 = vmatprep.subr.mxu0 0.0
    %500 = vmatpush1.msra.mxu0 %v434
    %501 = vmatprep.subr.mxu0 0.0
    %502 = vmatpush2.msra.mxu0 0.0
    %503 = vmatprep.subr.mxu0 0.0
    %504 = vmatpush2.msra.mxu0 0.0
    %505 = vmatprep.subr.mxu0 0.0
    %506 = vmatpush2.msra.mxu0 0.0
    %507 = vmatprep.subr.mxu0 0.0
    %508 = vmatpush2.msra.mxu0 0.0
    %509 = vmatprep.subr.mxu0 0.0
    %510 = vmatpush2.msra.mxu0 0.0
    %511 = vmatprep.subr.mxu0 0.0
    %512 = vmatpush2.msra.mxu0 0.0
    %513 = vmatprep.subr.mxu0 0.0
    %514 = vmatpush2.msra.mxu0 0.0
    %515 = vmatprep.subr.mxu0 0.0
    %516 = vmatpush2.msra.mxu0 0.0
    %517 = vmatprep.subr.mxu0 0.0
    %518 = vmatpush2.msra.mxu0 0.0
    %519 = vmatprep.subr.mxu0 0.0
    %520 = vmatpush2.msra.mxu0 0.0
    %521 = vmatprep.subr.mxu0 0.0
    %522 = vmatpush2.msra.mxu0 0.0
    %523 = vmatprep.subr.mxu0 0.0
    %524 = vmatpush2.msra.mxu0 0.0
    %525 = vmatprep.subr.mxu0 0.0
    %526 = vmatpush2.msra.mxu0 0.0
    %527 = vmatprep.subr.mxu0 0.0
    %528 = vmatpush2.msra.mxu0 0.0
    %529 = vmatprep.subr.mxu0 0.0
    %530 = vmatpush2.msra.mxu0 0.0
    %531 = vmatprep.subr.mxu0 0.0
    %532 = vmatpush2.msra.mxu0 0.0
    %533 = vmatprep.mubr.f32.mxu0 0.0
    %534 = vmatmul.mubr.f32.gmra.mxu0 %v446
    %v535 = vpop.f32.mrf.mxu0
    %v536 = vadd.f32 %v443, %v535
    %v537 = vpop.f32.mrf.mxu0
    %538 = vmatprep.mubr.f32.mxu0 0.0
    %539 = vmatmul.mubr.f32.gmra.mxu0 %v449
    %v540 = vpop.f32.mrf.mxu0
    %v541 = vadd.f32 %v443, %v540
    %v542 = vpop.f32.mrf.mxu0
    %543 = vmatprep.mubr.f32.mxu0 0.0
    %544 = vmatmul.mubr.f32.gmra.mxu0 %v452
    %v545 = vpop.f32.mrf.mxu0
    %v546 = vadd.f32 %v443, %v545
    %v547 = vpop.f32.mrf.mxu0
    %548 = vmatprep.mubr.f32.mxu0 0.0
    %549 = vmatmul.mubr.f32.gmra.mxu0 %v455
    %v550 = vpop.f32.mrf.mxu0
    %v551 = vadd.f32 %v443, %v550
    %v552 = vpop.f32.mrf.mxu0
    %553 = vmatprep.mubr.f32.mxu0 0.0
    %554 = vmatmul.mubr.f32.gmra.mxu0 %v458
    %v555 = vpop.f32.mrf.mxu0
    %v556 = vadd.f32 %v443, %v555
    %v557 = vpop.f32.mrf.mxu0
    %558 = vmatprep.mubr.f32.mxu0 0.0
    %559 = vmatmul.mubr.f32.gmra.mxu0 %v461
    %v560 = vpop.f32.mrf.mxu0
    %v561 = vadd.f32 %v443, %v560
    %v562 = vpop.f32.mrf.mxu0
    %563 = vmatprep.mubr.f32.mxu0 0.0
    %564 = vmatmul.mubr.f32.gmra.mxu0 %v464
    %v565 = vpop.f32.mrf.mxu0
    %v566 = vadd.f32 %v443, %v565
    %v567 = vpop.f32.mrf.mxu0
    %568 = vmatprep.mubr.f32.mxu0 0.0
    %569 = vmatmul.mubr.f32.gmra.mxu0 %v467
    %v570 = vpop.f32.mrf.mxu0
    %v571 = vadd.f32 %v443, %v570
    %v572 = vpop.f32.mrf.mxu0
    %573 = vdwg.mxu0
    %v574 = vld [vmem:[#allocation6] sm:$0xff]
    %v575 = vld [vmem:[#allocation6 + $0x8] sm:$0xff]
    %v576 = vld [vmem:[#allocation6 + $0x10] sm:$0xff]
    %v577 = vld [vmem:[#allocation6 + $0x18] sm:$0xff]
    %v578 = vld [vmem:[%s11] sm:$0x1]
    %v579 = vld [vmem:[%s1] sm:$0xff]
    %v581 = vlaneseq
    %v582 = vshrl.u32 %v581, 7
    %v583 = vsub.s32 0, %v582
    %v584 = vrot.slane %v578, %v583
    %v587 = vsel %vm114, %v579, 0
    %589 = vmatprep.subr.mxu0 0.0
    %590 = vmatpush1.msra.mxu0 0.0
    %591 = vmatprep.subr.mxu0 0.0
    %592 = vmatpush1.msra.mxu0 0.0
    %593 = vmatprep.subr.mxu0 0.0
    %594 = vmatpush1.msra.mxu0 0.0
    %595 = vmatprep.subr.mxu0 0.0
    %596 = vmatpush1.msra.mxu0 0.0
    %597 = vmatprep.subr.mxu0 0.0
    %598 = vmatpush1.msra.mxu0 0.0
    %599 = vmatprep.subr.mxu0 0.0
    %600 = vmatpush1.msra.mxu0 0.0
    %601 = vmatprep.subr.mxu0 0.0
    %602 = vmatpush1.msra.mxu0 0.0
    %603 = vmatprep.subr.mxu0 0.0
    %604 = vmatpush1.msra.mxu0 0.0
    %605 = vmatprep.subr.mxu0 0.0
    %606 = vmatpush1.msra.mxu0 0.0
    %607 = vmatprep.subr.mxu0 0.0
    %608 = vmatpush1.msra.mxu0 0.0
    %609 = vmatprep.subr.mxu0 0.0
    %610 = vmatpush1.msra.mxu0 0.0
    %611 = vmatprep.subr.mxu0 0.0
    %612 = vmatpush1.msra.mxu0 0.0
    %613 = vmatprep.subr.mxu0 0.0
    %614 = vmatpush1.msra.mxu0 %v577
    %615 = vmatprep.subr.mxu0 0.0
    %616 = vmatpush1.msra.mxu0 %v576
    %617 = vmatprep.subr.mxu0 0.0
    %618 = vmatpush1.msra.mxu0 %v575
    %619 = vmatprep.subr.mxu0 0.0
    %620 = vmatpush1.msra.mxu0 %v574
    %621 = vmatprep.subr.mxu0 0.0
    %622 = vmatpush2.msra.mxu0 0.0
    %623 = vmatprep.subr.mxu0 0.0
    %624 = vmatpush2.msra.mxu0 0.0
    %625 = vmatprep.subr.mxu0 0.0
    %626 = vmatpush2.msra.mxu0 0.0
    %627 = vmatprep.subr.mxu0 0.0
    %628 = vmatpush2.msra.mxu0 0.0
    %629 = vmatprep.subr.mxu0 0.0
    %630 = vmatpush2.msra.mxu0 0.0
    %631 = vmatprep.subr.mxu0 0.0
    %632 = vmatpush2.msra.mxu0 0.0
    %633 = vmatprep.subr.mxu0 0.0
    %634 = vmatpush2.msra.mxu0 0.0
    %635 = vmatprep.subr.mxu0 0.0
    %636 = vmatpush2.msra.mxu0 0.0
    %637 = vmatprep.subr.mxu0 0.0
    %638 = vmatpush2.msra.mxu0 0.0
    %639 = vmatprep.subr.mxu0 0.0
    %640 = vmatpush2.msra.mxu0 0.0
    %641 = vmatprep.subr.mxu0 0.0
    %642 = vmatpush2.msra.mxu0 0.0
    %643 = vmatprep.subr.mxu0 0.0
    %644 = vmatpush2.msra.mxu0 0.0
    %645 = vmatprep.subr.mxu0 0.0
    %646 = vmatpush2.msra.mxu0 0.0
    %647 = vmatprep.subr.mxu0 0.0
    %648 = vmatpush2.msra.mxu0 0.0
    %649 = vmatprep.subr.mxu0 0.0
    %650 = vmatpush2.msra.mxu0 0.0
    %651 = vmatprep.subr.mxu0 0.0
    %652 = vmatpush2.msra.mxu0 0.0
    %653 = vmatprep.mubr.f32.mxu0 0.0
    %654 = vmatmul.mubr.f32.gmra.mxu0 %v587
    %v655 = vpop.f32.mrf.mxu0
    %v656 = vadd.f32 %v584, %v655
    %v657 = vpop.f32.mrf.mxu0
    %658 = vdwg.mxu0
    %v659 = vadd.f32 %v536, %v656
    %v660 = vmul.f32 %v659, 0.5
    %v661 = vtanh.pop %v660
    %v662 = vmul.f32 %v661, 0.5
    %v663 = vadd.f32 %v662, 0.5
    %665 = vrot.lane.b32.xlu0 %v656, 64
    %v666 = vpop.permute.xlu0 %665
    %v668 = vmul.f32 %v663, %v666
    %670 = vrot.lane.b32.xlu0 %v668, 64
    %v671 = vpop.permute.xlu0 %670
    %v673 = vadd.f32 %v536, %v671
    %v674 = vtanh.pop %v673
    %676 = vrot.lane.b32.xlu0 %v674, 64
    %v677 = vpop.permute.xlu0 %676
    %v679 = vsub.f32 %v579, %v677
    %681 = vrot.lane.b32.xlu0 %v679, 32
    %v682 = vpop.permute.xlu0 %681
    %v684 = vmul.f32 %v663, %v682
    %686 = vrot.lane.b32.xlu0 %v684, 32
    %v687 = vpop.permute.xlu0 %686
    %v689 = vadd.f32 %v674, %v687
    %v690 = vadd.f32 %v689, 0.0
    %692 = vrot.lane.b32.xlu0 %v689, 64
    %v693 = vpop.permute.xlu0 %692
    %v694 = vsel %vm114, %v693, 0
    %696 = vmatprep.subr.mxu0 0.0
    %697 = vmatpush1.msra.mxu0 0.0
    %698 = vmatprep.subr.mxu0 0.0
    %699 = vmatpush1.msra.mxu0 0.0
    %700 = vmatprep.subr.mxu0 0.0
    %701 = vmatpush1.msra.mxu0 0.0
    %702 = vmatprep.subr.mxu0 0.0
    %703 = vmatpush1.msra.mxu0 0.0
    %704 = vmatprep.subr.mxu0 0.0
    %705 = vmatpush1.msra.mxu0 0.0
    %706 = vmatprep.subr.mxu0 0.0
    %707 = vmatpush1.msra.mxu0 0.0
    %708 = vmatprep.subr.mxu0 0.0
    %709 = vmatpush1.msra.mxu0 0.0
    %710 = vmatprep.subr.mxu0 0.0
    %711 = vmatpush1.msra.mxu0 0.0
    %712 = vmatprep.subr.mxu0 0.0
    %713 = vmatpush1.msra.mxu0 0.0
    %714 = vmatprep.subr.mxu0 0.0
    %715 = vmatpush1.msra.mxu0 0.0
    %716 = vmatprep.subr.mxu0 0.0
    %717 = vmatpush1.msra.mxu0 0.0
    %718 = vmatprep.subr.mxu0 0.0
    %719 = vmatpush1.msra.mxu0 0.0
    %720 = vmatprep.subr.mxu0 0.0
    %721 = vmatpush1.msra.mxu0 %v577
    %722 = vmatprep.subr.mxu0 0.0
    %723 = vmatpush1.msra.mxu0 %v576
    %724 = vmatprep.subr.mxu0 0.0
    %725 = vmatpush1.msra.mxu0 %v575
    %726 = vmatprep.subr.mxu0 0.0
    %727 = vmatpush1.msra.mxu0 %v574
    %728 = vmatprep.subr.mxu0 0.0
    %729 = vmatpush2.msra.mxu0 0.0
    %730 = vmatprep.subr.mxu0 0.0
    %731 = vmatpush2.msra.mxu0 0.0
    %732 = vmatprep.subr.mxu0 0.0
    %733 = vmatpush2.msra.mxu0 0.0
    %734 = vmatprep.subr.mxu0 0.0
    %735 = vmatpush2.msra.mxu0 0.0
    %736 = vmatprep.subr.mxu0 0.0
    %737 = vmatpush2.msra.mxu0 0.0
    %738 = vmatprep.subr.mxu0 0.0
    %739 = vmatpush2.msra.mxu0 0.0
    %740 = vmatprep.subr.mxu0 0.0
    %741 = vmatpush2.msra.mxu0 0.0
    %742 = vmatprep.subr.mxu0 0.0
    %743 = vmatpush2.msra.mxu0 0.0
    %744 = vmatprep.subr.mxu0 0.0
    %745 = vmatpush2.msra.mxu0 0.0
    %746 = vmatprep.subr.mxu0 0.0
    %747 = vmatpush2.msra.mxu0 0.0
    %748 = vmatprep.subr.mxu0 0.0
    %749 = vmatpush2.msra.mxu0 0.0
    %750 = vmatprep.subr.mxu0 0.0
    %751 = vmatpush2.msra.mxu0 0.0
    %752 = vmatprep.subr.mxu0 0.0
    %753 = vmatpush2.msra.mxu0 0.0
    %754 = vmatprep.subr.mxu0 0.0
    %755 = vmatpush2.msra.mxu0 0.0
    %756 = vmatprep.subr.mxu0 0.0
    %757 = vmatpush2.msra.mxu0 0.0
    %758 = vmatprep.subr.mxu0 0.0
    %759 = vmatpush2.msra.mxu0 0.0
    %760 = vmatprep.mubr.f32.mxu0 0.0
    %761 = vmatmul.mubr.f32.gmra.mxu0 %v694
    %v762 = vpop.f32.mrf.mxu0
    %v763 = vadd.f32 %v584, %v762
    %v764 = vpop.f32.mrf.mxu0
    %765 = vdwg.mxu0
    %v766 = vadd.f32 %v541, %v763
    %v767 = vmul.f32 %v766, 0.5
    %v768 = vtanh.pop %v767
    %v769 = vmul.f32 %v768, 0.5
    %v770 = vadd.f32 %v769, 0.5
    %772 = vrot.lane.b32.xlu0 %v763, 64
    %v773 = vpop.permute.xlu0 %772
    %v775 = vmul.f32 %v770, %v773
    %777 = vrot.lane.b32.xlu0 %v775, 64
    %v778 = vpop.permute.xlu0 %777
    %v780 = vadd.f32 %v541, %v778
    %v781 = vtanh.pop %v780
    %v782 = vsub.f32 %v689, %v781
    %784 = vrot.lane.b32.xlu0 %v782, 96
    %v785 = vpop.permute.xlu0 %784
    %v787 = vmul.f32 %v770, %v785
    %789 = vrot.lane.b32.xlu0 %v787, 32
    %v790 = vpop.permute.xlu0 %789
    %v792 = vadd.f32 %v781, %v790
    %v793 = vadd.f32 %v690, %v792
    %795 = vrot.lane.b32.xlu0 %v792, 64
    %v796 = vpop.permute.xlu0 %795
    %v797 = vsel %vm114, %v796, 0
    %799 = vmatprep.subr.mxu0 0.0
    %800 = vmatpush1.msra.mxu0 0.0
    %801 = vmatprep.subr.mxu0 0.0
    %802 = vmatpush1.msra.mxu0 0.0
    %803 = vmatprep.subr.mxu0 0.0
    %804 = vmatpush1.msra.mxu0 0.0
    %805 = vmatprep.subr.mxu0 0.0
    %806 = vmatpush1.msra.mxu0 0.0
    %807 = vmatprep.subr.mxu0 0.0
    %808 = vmatpush1.msra.mxu0 0.0
    %809 = vmatprep.subr.mxu0 0.0
    %810 = vmatpush1.msra.mxu0 0.0
    %811 = vmatprep.subr.mxu0 0.0
    %812 = vmatpush1.msra.mxu0 0.0
    %813 = vmatprep.subr.mxu0 0.0
    %814 = vmatpush1.msra.mxu0 0.0
    %815 = vmatprep.subr.mxu0 0.0
    %816 = vmatpush1.msra.mxu0 0.0
    %817 = vmatprep.subr.mxu0 0.0
    %818 = vmatpush1.msra.mxu0 0.0
    %819 = vmatprep.subr.mxu0 0.0
    %820 = vmatpush1.msra.mxu0 0.0
    %821 = vmatprep.subr.mxu0 0.0
    %822 = vmatpush1.msra.mxu0 0.0
    %823 = vmatprep.subr.mxu0 0.0
    %824 = vmatpush1.msra.mxu0 %v577
    %825 = vmatprep.subr.mxu0 0.0
    %826 = vmatpush1.msra.mxu0 %v576
    %827 = vmatprep.subr.mxu0 0.0
    %828 = vmatpush1.msra.mxu0 %v575
    %829 = vmatprep.subr.mxu0 0.0
    %830 = vmatpush1.msra.mxu0 %v574
    %831 = vmatprep.subr.mxu0 0.0
    %832 = vmatpush2.msra.mxu0 0.0
    %833 = vmatprep.subr.mxu0 0.0
    %834 = vmatpush2.msra.mxu0 0.0
    %835 = vmatprep.subr.mxu0 0.0
    %836 = vmatpush2.msra.mxu0 0.0
    %837 = vmatprep.subr.mxu0 0.0
    %838 = vmatpush2.msra.mxu0 0.0
    %839 = vmatprep.subr.mxu0 0.0
    %840 = vmatpush2.msra.mxu0 0.0
    %841 = vmatprep.subr.mxu0 0.0
    %842 = vmatpush2.msra.mxu0 0.0
    %843 = vmatprep.subr.mxu0 0.0
    %844 = vmatpush2.msra.mxu0 0.0
    %845 = vmatprep.subr.mxu0 0.0
    %846 = vmatpush2.msra.mxu0 0.0
    %847 = vmatprep.subr.mxu0 0.0
    %848 = vmatpush2.msra.mxu0 0.0
    %849 = vmatprep.subr.mxu0 0.0
    %850 = vmatpush2.msra.mxu0 0.0
    %851 = vmatprep.subr.mxu0 0.0
    %852 = vmatpush2.msra.mxu0 0.0
    %853 = vmatprep.subr.mxu0 0.0
    %854 = vmatpush2.msra.mxu0 0.0
    %855 = vmatprep.subr.mxu0 0.0
    %856 = vmatpush2.msra.mxu0 0.0
    %857 = vmatprep.subr.mxu0 0.0
    %858 = vmatpush2.msra.mxu0 0.0
    %859 = vmatprep.subr.mxu0 0.0
    %860 = vmatpush2.msra.mxu0 0.0
    %861 = vmatprep.subr.mxu0 0.0
    %862 = vmatpush2.msra.mxu0 0.0
    %863 = vmatprep.mubr.f32.mxu0 0.0
    %864 = vmatmul.mubr.f32.gmra.mxu0 %v797
    %v865 = vpop.f32.mrf.mxu0
    %v866 = vadd.f32 %v584, %v865
    %v867 = vpop.f32.mrf.mxu0
    %868 = vdwg.mxu0
    %v869 = vadd.f32 %v546, %v866
    %v870 = vmul.f32 %v869, 0.5
    %v871 = vtanh.pop %v870
    %v872 = vmul.f32 %v871, 0.5
    %v873 = vadd.f32 %v872, 0.5
    %875 = vrot.lane.b32.xlu0 %v866, 64
    %v876 = vpop.permute.xlu0 %875
    %v878 = vmul.f32 %v873, %v876
    %880 = vrot.lane.b32.xlu0 %v878, 64
    %v881 = vpop.permute.xlu0 %880
    %v883 = vadd.f32 %v546, %v881
    %v884 = vtanh.pop %v883
    %v885 = vsub.f32 %v792, %v884
    %887 = vrot.lane.b32.xlu0 %v885, 96
    %v888 = vpop.permute.xlu0 %887
    %v890 = vmul.f32 %v873, %v888
    %892 = vrot.lane.b32.xlu0 %v890, 32
    %v893 = vpop.permute.xlu0 %892
    %v895 = vadd.f32 %v884, %v893
    %v896 = vadd.f32 %v793, %v895
    %898 = vrot.lane.b32.xlu0 %v895, 64
    %v899 = vpop.permute.xlu0 %898
    %v900 = vsel %vm114, %v899, 0
    %902 = vmatprep.subr.mxu0 0.0
    %903 = vmatpush1.msra.mxu0 0.0
    %904 = vmatprep.subr.mxu0 0.0
    %905 = vmatpush1.msra.mxu0 0.0
    %906 = vmatprep.subr.mxu0 0.0
    %907 = vmatpush1.msra.mxu0 0.0
    %908 = vmatprep.subr.mxu0 0.0
    %909 = vmatpush1.msra.mxu0 0.0
    %910 = vmatprep.subr.mxu0 0.0
    %911 = vmatpush1.msra.mxu0 0.0
    %912 = vmatprep.subr.mxu0 0.0
    %913 = vmatpush1.msra.mxu0 0.0
    %914 = vmatprep.subr.mxu0 0.0
    %915 = vmatpush1.msra.mxu0 0.0
    %916 = vmatprep.subr.mxu0 0.0
    %917 = vmatpush1.msra.mxu0 0.0
    %918 = vmatprep.subr.mxu0 0.0
    %919 = vmatpush1.msra.mxu0 0.0
    %920 = vmatprep.subr.mxu0 0.0
    %921 = vmatpush1.msra.mxu0 0.0
    %922 = vmatprep.subr.mxu0 0.0
    %923 = vmatpush1.msra.mxu0 0.0
    %924 = vmatprep.subr.mxu0 0.0
    %925 = vmatpush1.msra.mxu0 0.0
    %926 = vmatprep.subr.mxu0 0.0
    %927 = vmatpush1.msra.mxu0 %v577
    %928 = vmatprep.subr.mxu0 0.0
    %929 = vmatpush1.msra.mxu0 %v576
    %930 = vmatprep.subr.mxu0 0.0
    %931 = vmatpush1.msra.mxu0 %v575
    %932 = vmatprep.subr.mxu0 0.0
    %933 = vmatpush1.msra.mxu0 %v574
    %934 = vmatprep.subr.mxu0 0.0
    %935 = vmatpush2.msra.mxu0 0.0
    %936 = vmatprep.subr.mxu0 0.0
    %937 = vmatpush2.msra.mxu0 0.0
    %938 = vmatprep.subr.mxu0 0.0
    %939 = vmatpush2.msra.mxu0 0.0
    %940 = vmatprep.subr.mxu0 0.0
    %941 = vmatpush2.msra.mxu0 0.0
    %942 = vmatprep.subr.mxu0 0.0
    %943 = vmatpush2.msra.mxu0 0.0
    %944 = vmatprep.subr.mxu0 0.0
    %945 = vmatpush2.msra.mxu0 0.0
    %946 = vmatprep.subr.mxu0 0.0
    %947 = vmatpush2.msra.mxu0 0.0
    %948 = vmatprep.subr.mxu0 0.0
    %949 = vmatpush2.msra.mxu0 0.0
    %950 = vmatprep.subr.mxu0 0.0
    %951 = vmatpush2.msra.mxu0 0.0
    %952 = vmatprep.subr.mxu0 0.0
    %953 = vmatpush2.msra.mxu0 0.0
    %954 = vmatprep.subr.mxu0 0.0
    %955 = vmatpush2.msra.mxu0 0.0
    %956 = vmatprep.subr.mxu0 0.0
    %957 = vmatpush2.msra.mxu0 0.0
    %958 = vmatprep.subr.mxu0 0.0
    %959 = vmatpush2.msra.mxu0 0.0
    %960 = vmatprep.subr.mxu0 0.0
    %961 = vmatpush2.msra.mxu0 0.0
    %962 = vmatprep.subr.mxu0 0.0
    %963 = vmatpush2.msra.mxu0 0.0
    %964 = vmatprep.subr.mxu0 0.0
    %965 = vmatpush2.msra.mxu0 0.0
    %966 = vmatprep.mubr.f32.mxu0 0.0
    %967 = vmatmul.mubr.f32.gmra.mxu0 %v900
    %v968 = vpop.f32.mrf.mxu0
    %v969 = vadd.f32 %v584, %v968
    %v970 = vpop.f32.mrf.mxu0
    %971 = vdwg.mxu0
    %v972 = vadd.f32 %v551, %v969
    %v973 = vmul.f32 %v972, 0.5
    %v974 = vtanh.pop %v973
    %v975 = vmul.f32 %v974, 0.5
    %v976 = vadd.f32 %v975, 0.5
    %978 = vrot.lane.b32.xlu0 %v969, 64
    %v979 = vpop.permute.xlu0 %978
    %v981 = vmul.f32 %v976, %v979
    %983 = vrot.lane.b32.xlu0 %v981, 64
    %v984 = vpop.permute.xlu0 %983
    %v986 = vadd.f32 %v551, %v984
    %v987 = vtanh.pop %v986
    %v988 = vsub.f32 %v895, %v987
    %990 = vrot.lane.b32.xlu0 %v988, 96
    %v991 = vpop.permute.xlu0 %990
    %v993 = vmul.f32 %v976, %v991
    %995 = vrot.lane.b32.xlu0 %v993, 32
    %v996 = vpop.permute.xlu0 %995
    %v998 = vadd.f32 %v987, %v996
    %v999 = vadd.f32 %v896, %v998
    %1001 = vrot.lane.b32.xlu0 %v998, 64
    %v1002 = vpop.permute.xlu0 %1001
    %v1003 = vsel %vm114, %v1002, 0
    %1005 = vmatprep.subr.mxu0 0.0
    %1006 = vmatpush1.msra.mxu0 0.0
    %1007 = vmatprep.subr.mxu0 0.0
    %1008 = vmatpush1.msra.mxu0 0.0
    %1009 = vmatprep.subr.mxu0 0.0
    %1010 = vmatpush1.msra.mxu0 0.0
    %1011 = vmatprep.subr.mxu0 0.0
    %1012 = vmatpush1.msra.mxu0 0.0
    %1013 = vmatprep.subr.mxu0 0.0
    %1014 = vmatpush1.msra.mxu0 0.0
    %1015 = vmatprep.subr.mxu0 0.0
    %1016 = vmatpush1.msra.mxu0 0.0
    %1017 = vmatprep.subr.mxu0 0.0
    %1018 = vmatpush1.msra.mxu0 0.0
    %1019 = vmatprep.subr.mxu0 0.0
    %1020 = vmatpush1.msra.mxu0 0.0
    %1021 = vmatprep.subr.mxu0 0.0
    %1022 = vmatpush1.msra.mxu0 0.0
    %1023 = vmatprep.subr.mxu0 0.0
    %1024 = vmatpush1.msra.mxu0 0.0
    %1025 = vmatprep.subr.mxu0 0.0
    %1026 = vmatpush1.msra.mxu0 0.0
    %1027 = vmatprep.subr.mxu0 0.0
    %1028 = vmatpush1.msra.mxu0 0.0
    %1029 = vmatprep.subr.mxu0 0.0
    %1030 = vmatpush1.msra.mxu0 %v577
    %1031 = vmatprep.subr.mxu0 0.0
    %1032 = vmatpush1.msra.mxu0 %v576
    %1033 = vmatprep.subr.mxu0 0.0
    %1034 = vmatpush1.msra.mxu0 %v575
    %1035 = vmatprep.subr.mxu0 0.0
    %1036 = vmatpush1.msra.mxu0 %v574
    %1037 = vmatprep.subr.mxu0 0.0
    %1038 = vmatpush2.msra.mxu0 0.0
    %1039 = vmatprep.subr.mxu0 0.0
    %1040 = vmatpush2.msra.mxu0 0.0
    %1041 = vmatprep.subr.mxu0 0.0
    %1042 = vmatpush2.msra.mxu0 0.0
    %1043 = vmatprep.subr.mxu0 0.0
    %1044 = vmatpush2.msra.mxu0 0.0
    %1045 = vmatprep.subr.mxu0 0.0
    %1046 = vmatpush2.msra.mxu0 0.0
    %1047 = vmatprep.subr.mxu0 0.0
    %1048 = vmatpush2.msra.mxu0 0.0
    %1049 = vmatprep.subr.mxu0 0.0
    %1050 = vmatpush2.msra.mxu0 0.0
    %1051 = vmatprep.subr.mxu0 0.0
    %1052 = vmatpush2.msra.mxu0 0.0
    %1053 = vmatprep.subr.mxu0 0.0
    %1054 = vmatpush2.msra.mxu0 0.0
    %1055 = vmatprep.subr.mxu0 0.0
    %1056 = vmatpush2.msra.mxu0 0.0
    %1057 = vmatprep.subr.mxu0 0.0
    %1058 = vmatpush2.msra.mxu0 0.0
    %1059 = vmatprep.subr.mxu0 0.0
    %1060 = vmatpush2.msra.mxu0 0.0
    %1061 = vmatprep.subr.mxu0 0.0
    %1062 = vmatpush2.msra.mxu0 0.0
    %1063 = vmatprep.subr.mxu0 0.0
    %1064 = vmatpush2.msra.mxu0 0.0
    %1065 = vmatprep.subr.mxu0 0.0
    %1066 = vmatpush2.msra.mxu0 0.0
    %1067 = vmatprep.subr.mxu0 0.0
    %1068 = vmatpush2.msra.mxu0 0.0
    %1069 = vmatprep.mubr.f32.mxu0 0.0
    %1070 = vmatmul.mubr.f32.gmra.mxu0 %v1003
    %v1071 = vpop.f32.mrf.mxu0
    %v1072 = vadd.f32 %v584, %v1071
    %v1073 = vpop.f32.mrf.mxu0
    %1074 = vdwg.mxu0
    %v1075 = vadd.f32 %v556, %v1072
    %v1076 = vmul.f32 %v1075, 0.5
    %v1077 = vtanh.pop %v1076
    %v1078 = vmul.f32 %v1077, 0.5
    %v1079 = vadd.f32 %v1078, 0.5
    %1081 = vrot.lane.b32.xlu0 %v1072, 64
    %v1082 = vpop.permute.xlu0 %1081
    %v1084 = vmul.f32 %v1079, %v1082
    %1086 = vrot.lane.b32.xlu0 %v1084, 64
    %v1087 = vpop.permute.xlu0 %1086
    %v1089 = vadd.f32 %v556, %v1087
    %v1090 = vtanh.pop %v1089
    %v1091 = vsub.f32 %v998, %v1090
    %1093 = vrot.lane.b32.xlu0 %v1091, 96
    %v1094 = vpop.permute.xlu0 %1093
    %v1096 = vmul.f32 %v1079, %v1094
    %1098 = vrot.lane.b32.xlu0 %v1096, 32
    %v1099 = vpop.permute.xlu0 %1098
    %v1101 = vadd.f32 %v1090, %v1099
    %v1102 = vadd.f32 %v999, %v1101
    %1104 = vrot.lane.b32.xlu0 %v1101, 64
    %v1105 = vpop.permute.xlu0 %1104
    %v1106 = vsel %vm114, %v1105, 0
    %1108 = vmatprep.subr.mxu0 0.0
    %1109 = vmatpush1.msra.mxu0 0.0
    %1110 = vmatprep.subr.mxu0 0.0
    %1111 = vmatpush1.msra.mxu0 0.0
    %1112 = vmatprep.subr.mxu0 0.0
    %1113 = vmatpush1.msra.mxu0 0.0
    %1114 = vmatprep.subr.mxu0 0.0
    %1115 = vmatpush1.msra.mxu0 0.0
    %1116 = vmatprep.subr.mxu0 0.0
    %1117 = vmatpush1.msra.mxu0 0.0
    %1118 = vmatprep.subr.mxu0 0.0
    %1119 = vmatpush1.msra.mxu0 0.0
    %1120 = vmatprep.subr.mxu0 0.0
    %1121 = vmatpush1.msra.mxu0 0.0
    %1122 = vmatprep.subr.mxu0 0.0
    %1123 = vmatpush1.msra.mxu0 0.0
    %1124 = vmatprep.subr.mxu0 0.0
    %1125 = vmatpush1.msra.mxu0 0.0
    %1126 = vmatprep.subr.mxu0 0.0
    %1127 = vmatpush1.msra.mxu0 0.0
    %1128 = vmatprep.subr.mxu0 0.0
    %1129 = vmatpush1.msra.mxu0 0.0
    %1130 = vmatprep.subr.mxu0 0.0
    %1131 = vmatpush1.msra.mxu0 0.0
    %1132 = vmatprep.subr.mxu0 0.0
    %1133 = vmatpush1.msra.mxu0 %v577
    %1134 = vmatprep.subr.mxu0 0.0
    %1135 = vmatpush1.msra.mxu0 %v576
    %1136 = vmatprep.subr.mxu0 0.0
    %1137 = vmatpush1.msra.mxu0 %v575
    %1138 = vmatprep.subr.mxu0 0.0
    %1139 = vmatpush1.msra.mxu0 %v574
    %1140 = vmatprep.subr.mxu0 0.0
    %1141 = vmatpush2.msra.mxu0 0.0
    %1142 = vmatprep.subr.mxu0 0.0
    %1143 = vmatpush2.msra.mxu0 0.0
    %1144 = vmatprep.subr.mxu0 0.0
    %1145 = vmatpush2.msra.mxu0 0.0
    %1146 = vmatprep.subr.mxu0 0.0
    %1147 = vmatpush2.msra.mxu0 0.0
    %1148 = vmatprep.subr.mxu0 0.0
    %1149 = vmatpush2.msra.mxu0 0.0
    %1150 = vmatprep.subr.mxu0 0.0
    %1151 = vmatpush2.msra.mxu0 0.0
    %1152 = vmatprep.subr.mxu0 0.0
    %1153 = vmatpush2.msra.mxu0 0.0
    %1154 = vmatprep.subr.mxu0 0.0
    %1155 = vmatpush2.msra.mxu0 0.0
    %1156 = vmatprep.subr.mxu0 0.0
    %1157 = vmatpush2.msra.mxu0 0.0
    %1158 = vmatprep.subr.mxu0 0.0
    %1159 = vmatpush2.msra.mxu0 0.0
    %1160 = vmatprep.subr.mxu0 0.0
    %1161 = vmatpush2.msra.mxu0 0.0
    %1162 = vmatprep.subr.mxu0 0.0
    %1163 = vmatpush2.msra.mxu0 0.0
    %1164 = vmatprep.subr.mxu0 0.0
    %1165 = vmatpush2.msra.mxu0 0.0
    %1166 = vmatprep.subr.mxu0 0.0
    %1167 = vmatpush2.msra.mxu0 0.0
    %1168 = vmatprep.subr.mxu0 0.0
    %1169 = vmatpush2.msra.mxu0 0.0
    %1170 = vmatprep.subr.mxu0 0.0
    %1171 = vmatpush2.msra.mxu0 0.0
    %1172 = vmatprep.mubr.f32.mxu0 0.0
    %1173 = vmatmul.mubr.f32.gmra.mxu0 %v1106
    %v1174 = vpop.f32.mrf.mxu0
    %v1175 = vadd.f32 %v584, %v1174
    %v1176 = vpop.f32.mrf.mxu0
    %1177 = vdwg.mxu0
    %v1178 = vadd.f32 %v561, %v1175
    %v1179 = vmul.f32 %v1178, 0.5
    %v1180 = vtanh.pop %v1179
    %v1181 = vmul.f32 %v1180, 0.5
    %v1182 = vadd.f32 %v1181, 0.5
    %1184 = vrot.lane.b32.xlu0 %v1175, 64
    %v1185 = vpop.permute.xlu0 %1184
    %v1187 = vmul.f32 %v1182, %v1185
    %1189 = vrot.lane.b32.xlu0 %v1187, 64
    %v1190 = vpop.permute.xlu0 %1189
    %v1192 = vadd.f32 %v561, %v1190
    %v1193 = vtanh.pop %v1192
    %v1194 = vsub.f32 %v1101, %v1193
    %1196 = vrot.lane.b32.xlu0 %v1194, 96
    %v1197 = vpop.permute.xlu0 %1196
    %v1199 = vmul.f32 %v1182, %v1197
    %1201 = vrot.lane.b32.xlu0 %v1199, 32
    %v1202 = vpop.permute.xlu0 %1201
    %v1204 = vadd.f32 %v1193, %v1202
    %v1205 = vadd.f32 %v1102, %v1204
    %1207 = vrot.lane.b32.xlu0 %v1204, 64
    %v1208 = vpop.permute.xlu0 %1207
    %v1209 = vsel %vm114, %v1208, 0
    %1211 = vmatprep.subr.mxu0 0.0
    %1212 = vmatpush1.msra.mxu0 0.0
    %1213 = vmatprep.subr.mxu0 0.0
    %1214 = vmatpush1.msra.mxu0 0.0
    %1215 = vmatprep.subr.mxu0 0.0
    %1216 = vmatpush1.msra.mxu0 0.0
    %1217 = vmatprep.subr.mxu0 0.0
    %1218 = vmatpush1.msra.mxu0 0.0
    %1219 = vmatprep.subr.mxu0 0.0
    %1220 = vmatpush1.msra.mxu0 0.0
    %1221 = vmatprep.subr.mxu0 0.0
    %1222 = vmatpush1.msra.mxu0 0.0
    %1223 = vmatprep.subr.mxu0 0.0
    %1224 = vmatpush1.msra.mxu0 0.0
    %1225 = vmatprep.subr.mxu0 0.0
    %1226 = vmatpush1.msra.mxu0 0.0
    %1227 = vmatprep.subr.mxu0 0.0
    %1228 = vmatpush1.msra.mxu0 0.0
    %1229 = vmatprep.subr.mxu0 0.0
    %1230 = vmatpush1.msra.mxu0 0.0
    %1231 = vmatprep.subr.mxu0 0.0
    %1232 = vmatpush1.msra.mxu0 0.0
    %1233 = vmatprep.subr.mxu0 0.0
    %1234 = vmatpush1.msra.mxu0 0.0
    %1235 = vmatprep.subr.mxu0 0.0
    %1236 = vmatpush1.msra.mxu0 %v577
    %1237 = vmatprep.subr.mxu0 0.0
    %1238 = vmatpush1.msra.mxu0 %v576
    %1239 = vmatprep.subr.mxu0 0.0
    %1240 = vmatpush1.msra.mxu0 %v575
    %1241 = vmatprep.subr.mxu0 0.0
    %1242 = vmatpush1.msra.mxu0 %v574
    %1243 = vmatprep.subr.mxu0 0.0
    %1244 = vmatpush2.msra.mxu0 0.0
    %1245 = vmatprep.subr.mxu0 0.0
    %1246 = vmatpush2.msra.mxu0 0.0
    %1247 = vmatprep.subr.mxu0 0.0
    %1248 = vmatpush2.msra.mxu0 0.0
    %1249 = vmatprep.subr.mxu0 0.0
    %1250 = vmatpush2.msra.mxu0 0.0
    %1251 = vmatprep.subr.mxu0 0.0
    %1252 = vmatpush2.msra.mxu0 0.0
    %1253 = vmatprep.subr.mxu0 0.0
    %1254 = vmatpush2.msra.mxu0 0.0
    %1255 = vmatprep.subr.mxu0 0.0
    %1256 = vmatpush2.msra.mxu0 0.0
    %1257 = vmatprep.subr.mxu0 0.0
    %1258 = vmatpush2.msra.mxu0 0.0
    %1259 = vmatprep.subr.mxu0 0.0
    %1260 = vmatpush2.msra.mxu0 0.0
    %1261 = vmatprep.subr.mxu0 0.0
    %1262 = vmatpush2.msra.mxu0 0.0
    %1263 = vmatprep.subr.mxu0 0.0
    %1264 = vmatpush2.msra.mxu0 0.0
    %1265 = vmatprep.subr.mxu0 0.0
    %1266 = vmatpush2.msra.mxu0 0.0
    %1267 = vmatprep.subr.mxu0 0.0
    %1268 = vmatpush2.msra.mxu0 0.0
    %1269 = vmatprep.subr.mxu0 0.0
    %1270 = vmatpush2.msra.mxu0 0.0
    %1271 = vmatprep.subr.mxu0 0.0
    %1272 = vmatpush2.msra.mxu0 0.0
    %1273 = vmatprep.subr.mxu0 0.0
    %1274 = vmatpush2.msra.mxu0 0.0
    %1275 = vmatprep.mubr.f32.mxu0 0.0
    %1276 = vmatmul.mubr.f32.gmra.mxu0 %v1209
    %v1277 = vpop.f32.mrf.mxu0
    %v1278 = vadd.f32 %v584, %v1277
    %v1279 = vpop.f32.mrf.mxu0
    %1280 = vdwg.mxu0
    %v1281 = vadd.f32 %v566, %v1278
    %v1282 = vmul.f32 %v1281, 0.5
    %v1283 = vtanh.pop %v1282
    %v1284 = vmul.f32 %v1283, 0.5
    %v1285 = vadd.f32 %v1284, 0.5
    %1287 = vrot.lane.b32.xlu0 %v1278, 64
    %v1288 = vpop.permute.xlu0 %1287
    %v1290 = vmul.f32 %v1285, %v1288
    %1292 = vrot.lane.b32.xlu0 %v1290, 64
    %v1293 = vpop.permute.xlu0 %1292
    %v1295 = vadd.f32 %v566, %v1293
    %v1296 = vtanh.pop %v1295
    %v1297 = vsub.f32 %v1204, %v1296
    %1299 = vrot.lane.b32.xlu0 %v1297, 96
    %v1300 = vpop.permute.xlu0 %1299
    %v1302 = vmul.f32 %v1285, %v1300
    %1304 = vrot.lane.b32.xlu0 %v1302, 32
    %v1305 = vpop.permute.xlu0 %1304
    %v1307 = vadd.f32 %v1296, %v1305
    %v1308 = vadd.f32 %v1205, %v1307
    %1310 = vrot.lane.b32.xlu0 %v1307, 64
    %v1311 = vpop.permute.xlu0 %1310
    %v1312 = vsel %vm114, %v1311, 0
    %1314 = vmatprep.subr.mxu0 0.0
    %1315 = vmatpush1.msra.mxu0 0.0
    %1316 = vmatprep.subr.mxu0 0.0
    %1317 = vmatpush1.msra.mxu0 0.0
    %1318 = vmatprep.subr.mxu0 0.0
    %1319 = vmatpush1.msra.mxu0 0.0
    %1320 = vmatprep.subr.mxu0 0.0
    %1321 = vmatpush1.msra.mxu0 0.0
    %1322 = vmatprep.subr.mxu0 0.0
    %1323 = vmatpush1.msra.mxu0 0.0
    %1324 = vmatprep.subr.mxu0 0.0
    %1325 = vmatpush1.msra.mxu0 0.0
    %1326 = vmatprep.subr.mxu0 0.0
    %1327 = vmatpush1.msra.mxu0 0.0
    %1328 = vmatprep.subr.mxu0 0.0
    %1329 = vmatpush1.msra.mxu0 0.0
    %1330 = vmatprep.subr.mxu0 0.0
    %1331 = vmatpush1.msra.mxu0 0.0
    %1332 = vmatprep.subr.mxu0 0.0
    %1333 = vmatpush1.msra.mxu0 0.0
    %1334 = vmatprep.subr.mxu0 0.0
    %1335 = vmatpush1.msra.mxu0 0.0
    %1336 = vmatprep.subr.mxu0 0.0
    %1337 = vmatpush1.msra.mxu0 0.0
    %1338 = vmatprep.subr.mxu0 0.0
    %1339 = vmatpush1.msra.mxu0 %v577
    %1340 = vmatprep.subr.mxu0 0.0
    %1341 = vmatpush1.msra.mxu0 %v576
    %1342 = vmatprep.subr.mxu0 0.0
    %1343 = vmatpush1.msra.mxu0 %v575
    %1344 = vmatprep.subr.mxu0 0.0
    %1345 = vmatpush1.msra.mxu0 %v574
    %1346 = vmatprep.subr.mxu0 0.0
    %1347 = vmatpush2.msra.mxu0 0.0
    %1348 = vmatprep.subr.mxu0 0.0
    %1349 = vmatpush2.msra.mxu0 0.0
    %1350 = vmatprep.subr.mxu0 0.0
    %1351 = vmatpush2.msra.mxu0 0.0
    %1352 = vmatprep.subr.mxu0 0.0
    %1353 = vmatpush2.msra.mxu0 0.0
    %1354 = vmatprep.subr.mxu0 0.0
    %1355 = vmatpush2.msra.mxu0 0.0
    %1356 = vmatprep.subr.mxu0 0.0
    %1357 = vmatpush2.msra.mxu0 0.0
    %1358 = vmatprep.subr.mxu0 0.0
    %1359 = vmatpush2.msra.mxu0 0.0
    %1360 = vmatprep.subr.mxu0 0.0
    %1361 = vmatpush2.msra.mxu0 0.0
    %1362 = vmatprep.subr.mxu0 0.0
    %1363 = vmatpush2.msra.mxu0 0.0
    %1364 = vmatprep.subr.mxu0 0.0
    %1365 = vmatpush2.msra.mxu0 0.0
    %1366 = vmatprep.subr.mxu0 0.0
    %1367 = vmatpush2.msra.mxu0 0.0
    %1368 = vmatprep.subr.mxu0 0.0
    %1369 = vmatpush2.msra.mxu0 0.0
    %1370 = vmatprep.subr.mxu0 0.0
    %1371 = vmatpush2.msra.mxu0 0.0
    %1372 = vmatprep.subr.mxu0 0.0
    %1373 = vmatpush2.msra.mxu0 0.0
    %1374 = vmatprep.subr.mxu0 0.0
    %1375 = vmatpush2.msra.mxu0 0.0
    %1376 = vmatprep.subr.mxu0 0.0
    %1377 = vmatpush2.msra.mxu0 0.0
    %1378 = vmatprep.mubr.f32.mxu0 0.0
    %1379 = vmatmul.mubr.f32.gmra.mxu0 %v1312
    %v1380 = vpop.f32.mrf.mxu0
    %v1381 = vadd.f32 %v584, %v1380
    %v1382 = vpop.f32.mrf.mxu0
    %1383 = vdwg.mxu0
    %v1384 = vadd.f32 %v571, %v1381
    %v1385 = vmul.f32 %v1384, 0.5
    %v1386 = vtanh.pop %v1385
    %v1387 = vmul.f32 %v1386, 0.5
    %v1388 = vadd.f32 %v1387, 0.5
    %1390 = vrot.lane.b32.xlu0 %v1381, 64
    %v1391 = vpop.permute.xlu0 %1390
    %v1393 = vmul.f32 %v1388, %v1391
    %1395 = vrot.lane.b32.xlu0 %v1393, 64
    %v1396 = vpop.permute.xlu0 %1395
    %v1398 = vadd.f32 %v571, %v1396
    %v1399 = vtanh.pop %v1398
    %v1400 = vsub.f32 %v1307, %v1399
    %1402 = vrot.lane.b32.xlu0 %v1400, 96
    %v1403 = vpop.permute.xlu0 %1402
    %v1405 = vmul.f32 %v1388, %v1403
    %1407 = vrot.lane.b32.xlu0 %v1405, 32
    %v1408 = vpop.permute.xlu0 %1407
    %v1410 = vadd.f32 %v1399, %v1408
    %v1411 = vadd.f32 %v1308, %v1410
    %v1412 = vld [vmem:[#allocation8] sm:$0xff]
    %v1413 = vld [vmem:[#allocation8 + $0x8] sm:$0xff]
    %v1414 = vld [vmem:[#allocation8 + $0x10] sm:$0xff]
    %v1415 = vld [vmem:[#allocation8 + $0x18] sm:$0xff]
    %v1416 = vld [vmem:[%s13] sm:$0x1]
    %v1418 = vlaneseq
    %v1419 = vshrl.u32 %v1418, 7
    %v1420 = vsub.s32 0, %v1419
    %v1421 = vrot.slane %v1416, %v1420
    %1424 = vrot.lane.b32.xlu0 %v1411, 64
    %v1425 = vpop.permute.xlu0 %1424
    %v1426 = vsel %vm114, %v1425, 0
    %1428 = vmatprep.subr.mxu0 0.0
    %1429 = vmatpush1.msra.mxu0 0.0
    %1430 = vmatprep.subr.mxu0 0.0
    %1431 = vmatpush1.msra.mxu0 0.0
    %1432 = vmatprep.subr.mxu0 0.0
    %1433 = vmatpush1.msra.mxu0 0.0
    %1434 = vmatprep.subr.mxu0 0.0
    %1435 = vmatpush1.msra.mxu0 0.0
    %1436 = vmatprep.subr.mxu0 0.0
    %1437 = vmatpush1.msra.mxu0 0.0
    %1438 = vmatprep.subr.mxu0 0.0
    %1439 = vmatpush1.msra.mxu0 0.0
    %1440 = vmatprep.subr.mxu0 0.0
    %1441 = vmatpush1.msra.mxu0 0.0
    %1442 = vmatprep.subr.mxu0 0.0
    %1443 = vmatpush1.msra.mxu0 0.0
    %1444 = vmatprep.subr.mxu0 0.0
    %1445 = vmatpush1.msra.mxu0 0.0
    %1446 = vmatprep.subr.mxu0 0.0
    %1447 = vmatpush1.msra.mxu0 0.0
    %1448 = vmatprep.subr.mxu0 0.0
    %1449 = vmatpush1.msra.mxu0 0.0
    %1450 = vmatprep.subr.mxu0 0.0
    %1451 = vmatpush1.msra.mxu0 0.0
    %1452 = vmatprep.subr.mxu0 0.0
    %1453 = vmatpush1.msra.mxu0 %v1415
    %1454 = vmatprep.subr.mxu0 0.0
    %1455 = vmatpush1.msra.mxu0 %v1414
    %1456 = vmatprep.subr.mxu0 0.0
    %1457 = vmatpush1.msra.mxu0 %v1413
    %1458 = vmatprep.subr.mxu0 0.0
    %1459 = vmatpush1.msra.mxu0 %v1412
    %1460 = vmatprep.subr.mxu0 0.0
    %1461 = vmatpush2.msra.mxu0 0.0
    %1462 = vmatprep.subr.mxu0 0.0
    %1463 = vmatpush2.msra.mxu0 0.0
    %1464 = vmatprep.subr.mxu0 0.0
    %1465 = vmatpush2.msra.mxu0 0.0
    %1466 = vmatprep.subr.mxu0 0.0
    %1467 = vmatpush2.msra.mxu0 0.0
    %1468 = vmatprep.subr.mxu0 0.0
    %1469 = vmatpush2.msra.mxu0 0.0
    %1470 = vmatprep.subr.mxu0 0.0
    %1471 = vmatpush2.msra.mxu0 0.0
    %1472 = vmatprep.subr.mxu0 0.0
    %1473 = vmatpush2.msra.mxu0 0.0
    %1474 = vmatprep.subr.mxu0 0.0
    %1475 = vmatpush2.msra.mxu0 0.0
    %1476 = vmatprep.subr.mxu0 0.0
    %1477 = vmatpush2.msra.mxu0 0.0
    %1478 = vmatprep.subr.mxu0 0.0
    %1479 = vmatpush2.msra.mxu0 0.0
    %1480 = vmatprep.subr.mxu0 0.0
    %1481 = vmatpush2.msra.mxu0 0.0
    %1482 = vmatprep.subr.mxu0 0.0
    %1483 = vmatpush2.msra.mxu0 0.0
    %1484 = vmatprep.subr.mxu0 0.0
    %1485 = vmatpush2.msra.mxu0 0.0
    %1486 = vmatprep.subr.mxu0 0.0
    %1487 = vmatpush2.msra.mxu0 0.0
    %1488 = vmatprep.subr.mxu0 0.0
    %1489 = vmatpush2.msra.mxu0 0.0
    %1490 = vmatprep.subr.mxu0 0.0
    %1491 = vmatpush2.msra.mxu0 0.0
    %1492 = vmatprep.mubr.f32.mxu0 0.0
    %1493 = vmatmul.mubr.f32.gmra.mxu0 %v1426
    %v1494 = vpop.f32.mrf.mxu0
    %v1495 = vadd.f32 %v1421, %v1494
    %v1496 = vpop.f32.mrf.mxu0
    %1497 = vdwg.mxu0
    %1498 = vst [vmem:[%s15] sm:$0xff] %v1495
    %v1499 = vld [vmem:[%s14] sm:$0xff]
    %v1500 = vld [vmem:[%s14 + $0x8] sm:$0xff]
    %v1501 = vld [vmem:[%s14 + $0x10] sm:$0xff]
    %v1502 = vld [vmem:[%s14 + $0x18] sm:$0xff]
    %1504 = vrot.lane.b32.xlu0 %v1410, 64
    %v1505 = vpop.permute.xlu0 %1504
    %v1506 = vsel %vm114, %v1505, 0
    %1508 = vmatprep.subr.mxu0 0.0
    %1509 = vmatpush1.msra.mxu0 0.0
    %1510 = vmatprep.subr.mxu0 0.0
    %1511 = vmatpush1.msra.mxu0 0.0
    %1512 = vmatprep.subr.mxu0 0.0
    %1513 = vmatpush1.msra.mxu0 0.0
    %1514 = vmatprep.subr.mxu0 0.0
    %1515 = vmatpush1.msra.mxu0 0.0
    %1516 = vmatprep.subr.mxu0 0.0
    %1517 = vmatpush1.msra.mxu0 0.0
    %1518 = vmatprep.subr.mxu0 0.0
    %1519 = vmatpush1.msra.mxu0 0.0
    %1520 = vmatprep.subr.mxu0 0.0
    %1521 = vmatpush1.msra.mxu0 0.0
    %1522 = vmatprep.subr.mxu0 0.0
    %1523 = vmatpush1.msra.mxu0 0.0
    %1524 = vmatprep.subr.mxu0 0.0
    %1525 = vmatpush1.msra.mxu0 0.0
    %1526 = vmatprep.subr.mxu0 0.0
    %1527 = vmatpush1.msra.mxu0 0.0
    %1528 = vmatprep.subr.mxu0 0.0
    %1529 = vmatpush1.msra.mxu0 0.0
    %1530 = vmatprep.subr.mxu0 0.0
    %1531 = vmatpush1.msra.mxu0 0.0
    %1532 = vmatprep.subr.mxu0 0.0
    %1533 = vmatpush1.msra.mxu0 %v1502
    %1534 = vmatprep.subr.mxu0 0.0
    %1535 = vmatpush1.msra.mxu0 %v1501
    %1536 = vmatprep.subr.mxu0 0.0
    %1537 = vmatpush1.msra.mxu0 %v1500
    %1538 = vmatprep.subr.mxu0 0.0
    %1539 = vmatpush1.msra.mxu0 %v1499
    %1540 = vmatprep.subr.mxu0 0.0
    %1541 = vmatpush2.msra.mxu0 0.0
    %1542 = vmatprep.subr.mxu0 0.0
    %1543 = vmatpush2.msra.mxu0 0.0
    %1544 = vmatprep.subr.mxu0 0.0
    %1545 = vmatpush2.msra.mxu0 0.0
    %1546 = vmatprep.subr.mxu0 0.0
    %1547 = vmatpush2.msra.mxu0 0.0
    %1548 = vmatprep.subr.mxu0 0.0
    %1549 = vmatpush2.msra.mxu0 0.0
    %1550 = vmatprep.subr.mxu0 0.0
    %1551 = vmatpush2.msra.mxu0 0.0
    %1552 = vmatprep.subr.mxu0 0.0
    %1553 = vmatpush2.msra.mxu0 0.0
    %1554 = vmatprep.subr.mxu0 0.0
    %1555 = vmatpush2.msra.mxu0 0.0
    %1556 = vmatprep.subr.mxu0 0.0
    %1557 = vmatpush2.msra.mxu0 0.0
    %1558 = vmatprep.subr.mxu0 0.0
    %1559 = vmatpush2.msra.mxu0 0.0
    %1560 = vmatprep.subr.mxu0 0.0
    %1561 = vmatpush2.msra.mxu0 0.0
    %1562 = vmatprep.subr.mxu0 0.0
    %1563 = vmatpush2.msra.mxu0 0.0
    %1564 = vmatprep.subr.mxu0 0.0
    %1565 = vmatpush2.msra.mxu0 0.0
    %1566 = vmatprep.subr.mxu0 0.0
    %1567 = vmatpush2.msra.mxu0 0.0
    %1568 = vmatprep.subr.mxu0 0.0
    %1569 = vmatpush2.msra.mxu0 0.0
    %1570 = vmatprep.subr.mxu0 0.0
    %1571 = vmatpush2.msra.mxu0 0.0
    %1572 = vmatprep.mubr.f32.mxu0 0.0
    %1573 = vmatmul.mubr.f32.gmra.mxu0 %v1506
    %v1574 = vpop.f32.mrf.mxu0
    %v1575 = vadd.f32 0.0, %v1574
    %v1576 = vpop.f32.mrf.mxu0
    %1577 = vdwg.mxu0
    %1578 = vst [vmem:[%s16] sm:$0xff] %v1575
    // Predicated region
    $region74: #{vanilla_decoder_forward.1} parent=1 // pred_check
      _
    $region75: #{vanilla_decoder_forward.1} parent=1 // pred_check_branch
      %1580 = sbr.rel (0) target = $region77
    $region76: #{vanilla_decoder_forward.1} parent=1 // pred_region
      _
    $region77: #{vanilla_decoder_forward.1} parent=1 // pred_fallthru
      _
    // Predicated region
    $region78: #{vanilla_decoder_forward.1} parent=1 // pred_check
      _
    $region79: #{vanilla_decoder_forward.1} parent=1 // pred_check_branch
      %1582 = sbr.rel (0) target = $region81
    $region80: #{vanilla_decoder_forward.1} parent=1 // pred_region
      _
    $region81: #{vanilla_decoder_forward.1} parent=1 // pred_fallthru
      _
    // Predicated region
    $region82: #{vanilla_decoder_forward.1} parent=1 // pred_check
      _
    $region83: #{vanilla_decoder_forward.1} parent=1 // pred_check_branch
      %1584 = sbr.rel (0) target = $region85
    $region84: #{vanilla_decoder_forward.1} parent=1 // pred_region
      _
    $region85: #{vanilla_decoder_forward.1} parent=1 // pred_fallthru
      _
    // Predicated region
    $region86: #{vanilla_decoder_forward.1} parent=1 // pred_check
      _
    $region87: #{vanilla_decoder_forward.1} parent=1 // pred_check_branch
      %1586 = sbr.rel (0) target = $region89
    $region88: #{vanilla_decoder_forward.1} parent=1 // pred_region
      _
    $region89: #{vanilla_decoder_forward.1} parent=1 // pred_fallthru
      _
    %1587 = vsyncpa [#allocation5], 1
    %1588 = vsyncpa [#allocation7], 1

</llo_original>
